<compile_context>
chip_gen: v6e
topology: v6e:2x2x1
jax: 0.10.0
libtpu: 0.0.40
codegen_flags: <defaults>
</compile_context>

<pallas_src>
import functools
import numpy as np
import jax
import jax.numpy as jnp
from jax.experimental import pallas as pl
from jax.experimental.pallas import tpu as pltpu


def _round_up(v: int, m: int) -> int:
    return ((v + m - 1) // m) * m


def _continuous_embedding_kernel(x_ref, coef_ref, wsin_ref, wcos_ref,
                                 wlast_ref, b_ref, o_ref):
    # x_ref:    (TP, PACK)        PACK logical scalar inputs per packed row
    # coef_ref: (1, C)            PeriodicActivation params
    # wsin_ref: (C, D)            Linear weight rows for the sin features
    # wcos_ref: (C, D)            Linear weight rows for the cos features
    # wlast_ref:(1, D)            Linear weight row for the raw x column
    # b_ref:    (1, D)            Linear bias
    # o_ref:    (TP, PACK*D)      lane-dense packed output
    d = b_ref.shape[1]
    pack = x_ref.shape[1]

    two_pi_coef = coef_ref[...] * (2.0 * np.pi)      # (1, C), computed once
    wsin = wsin_ref[...]                             # (C, D)
    wcos = wcos_ref[...]                             # (C, D)
    wlast = wlast_ref[...]                           # (1, D)
    bias = b_ref[...]                                # (1, D)

    # Static (trace-time) unroll over the PACK lane bands of the output.
    for j in range(pack):
        xj = x_ref[:, j:j + 1]                       # (TP, 1)
        ang = xj * two_pi_coef                       # (TP, C)
        y = jnp.dot(jnp.sin(ang), wsin,
                    preferred_element_type=jnp.float32)       # MXU, K=C
        y = y + jnp.dot(jnp.cos(ang), wcos,
                        preferred_element_type=jnp.float32)   # MXU, K=C
        y = y + xj * wlast + bias                    # VPU rank-1 tail + bias
        o_ref[:, j * d:(j + 1) * d] = jnp.maximum(y, 0.0)     # ReLU


def continuous_embedding(x, coefs, weight, bias):
    """x: (..., 1) float32. Returns (..., output_dim) float32.

    coefs:  (num_coefs,)            -- PeriodicActivation.params
    weight: (output_dim, in_dim)    -- torch Linear weight (out, in)
    bias:   (output_dim,)           -- torch Linear bias
    """
    assert x.shape[-1] == 1
    lead = x.shape[:-1]
    n = int(np.prod(lead)) if lead else 1
    num_coefs = int(coefs.shape[0])
    output_dim = int(weight.shape[0])
    in_dim = 2 * num_coefs + 1
    assert weight.shape[1] == in_dim
    # TODO(synk): periodic_activation_num_coefs == 0 path (pure Linear on the
    # raw scalar, no sin/cos features) is not implemented in this kernel.
    assert num_coefs > 0

    # Pack PACK logical rows per 128-lane output row when output_dim divides 128.
    if output_dim <= 128 and 128 % output_dim == 0:
        pack = 128 // output_dim
    else:
        pack = 1
    lane_out = pack * output_dim

    # Packed-row tile: up to 1024 packed rows (=4096 logical rows at D=32);
    # ~0.5 MiB in + 0.5 MiB out per buffer -> fits default scoped VMEM on
    # v5e / v6e / v7x with double buffering.
    tp = min(1024, _round_up(max(pl.cdiv(n, pack), 1), 8))
    tile_rows = tp * pack
    n_pad = _round_up(n, tile_rows)
    n_packed = n_pad // pack
    grid = (n_packed // tp,)

    # ---- operand prep (wrapper-side layout plumbing only) ----
    x_flat = x.reshape(n).astype(jnp.float32)
    if n_pad != n:
        x_flat = jnp.pad(x_flat, (0, n_pad - n))
    x2 = x_flat.reshape(n_packed, pack)              # row-major: (p, j) = row p*pack+j

    coef2 = coefs.reshape(1, num_coefs).astype(jnp.float32)
    w_t = weight.T.astype(jnp.float32)               # (in_dim, D)
    w_sin = w_t[:num_coefs]                          # (C, D)
    w_cos = w_t[num_coefs:2 * num_coefs]             # (C, D)
    w_last = w_t[2 * num_coefs:2 * num_coefs + 1]    # (1, D)
    b2 = bias.reshape(1, output_dim).astype(jnp.float32)

    out_packed = pl.pallas_call(
        _continuous_embedding_kernel,
        out_shape=jax.ShapeDtypeStruct((n_packed, lane_out), jnp.float32),
        grid=grid,
        in_specs=[
            pl.BlockSpec((tp, pack), lambda i: (i, 0)),
            pl.BlockSpec((1, num_coefs), lambda i: (0, 0)),
            pl.BlockSpec((num_coefs, output_dim), lambda i: (0, 0)),
            pl.BlockSpec((num_coefs, output_dim), lambda i: (0, 0)),
            pl.BlockSpec((1, output_dim), lambda i: (0, 0)),
            pl.BlockSpec((1, output_dim), lambda i: (0, 0)),
        ],
        out_specs=pl.BlockSpec((tp, lane_out), lambda i: (i, 0)),
        compiler_params=pltpu.CompilerParams(
            dimension_semantics=("parallel",)),
    )(x2, coef2, w_sin, w_cos, w_last, b2)

    # (n_packed, pack*D) -> (n_pad, D) is a free row-major reshape.
    out = out_packed.reshape(n_pad, output_dim)[:n]
    return out.reshape(*lead, output_dim)


def _reference(x, coefs, weight, bias):
    # Pure-JAX reference matching the PyTorch module semantics.
    x_ = x * coefs * 2.0 * np.pi
    feats = jnp.concatenate([jnp.sin(x_), jnp.cos(x_), x], axis=-1)
    return jax.nn.relu(feats @ weight.T + bias)


if __name__ == "__main__":
    # Module hyperparams
    periodic_activation_num_coefs = 8
    periodic_activation_sigma = 1.0
    output_dim = 32

    # Small input: batch=2, seq=8, last dim must be 1
    key = jax.random.PRNGKey(0)
    k_x, k_coef, k_w, k_b = jax.random.split(key, 4)
    x = jax.random.normal(k_x, (2, 8, 1), dtype=jnp.float32)

    # Deterministic parameter init (synthetic; mirrors __init__ shapes)
    coefs = (jax.random.normal(k_coef, (periodic_activation_num_coefs,),
                               dtype=jnp.float32)
             * periodic_activation_sigma)
    in_dim = periodic_activation_num_coefs * 2 + 1
    lim = 1.0 / np.sqrt(in_dim)
    weight = jax.random.uniform(k_w, (output_dim, in_dim), minval=-lim,
                                maxval=lim, dtype=jnp.float32)
    bias = jax.random.uniform(k_b, (output_dim,), minval=-lim, maxval=lim,
                              dtype=jnp.float32)

    out = continuous_embedding(x, coefs, weight, bias)
    out = jax.block_until_ready(out)

    ref = _reference(x, coefs, weight, bias)
    np.testing.assert_allclose(np.asarray(out), np.asarray(ref),
                               rtol=1e-5, atol=1e-5)

    print("KERNEL_OK")
</pallas_src>

<mosaic_0001>
module attributes {stable_mosaic.version = 11 : i64} {
  func.func @_continuous_embedding_kernel(%arg0: i32, %arg1: memref<8x4xf32, #tpu.memory_space<vmem>>, %arg2: memref<1x8xf32, #tpu.memory_space<vmem>>, %arg3: memref<8x32xf32, #tpu.memory_space<vmem>>, %arg4: memref<8x32xf32, #tpu.memory_space<vmem>>, %arg5: memref<1x32xf32, #tpu.memory_space<vmem>>, %arg6: memref<1x32xf32, #tpu.memory_space<vmem>>, %arg7: memref<8x128xf32, #tpu.memory_space<vmem>>) attributes {dimension_semantics = [#tpu.dimension_semantics<parallel>], iteration_bounds = array<i64: 1>, scalar_prefetch = 0 : i64, scratch_operands = 0 : i64, tpu.core_type = #tpu.core_type<tc>, window_params = [{transform_indices = @transform_0, window_bounds = array<i64: 8, 4>}, {pipeline_mode = #tpu.pipeline_mode<synchronous>, transform_indices = @transform_1, window_bounds = array<i64: 1, 8>}, {pipeline_mode = #tpu.pipeline_mode<synchronous>, transform_indices = @transform_2, window_bounds = array<i64: 8, 32>}, {pipeline_mode = #tpu.pipeline_mode<synchronous>, transform_indices = @transform_3, window_bounds = array<i64: 8, 32>}, {pipeline_mode = #tpu.pipeline_mode<synchronous>, transform_indices = @transform_4, window_bounds = array<i64: 1, 32>}, {pipeline_mode = #tpu.pipeline_mode<synchronous>, transform_indices = @transform_5, window_bounds = array<i64: 1, 32>}, {transform_indices = @transform_6, window_bounds = array<i64: 8, 128>}]} {
    %c0 = arith.constant 0 : index
    %c0_0 = arith.constant 0 : index
    %0 = vector.load %arg2[%c0, %c0_0] : memref<1x8xf32, #tpu.memory_space<vmem>>, vector<1x8xf32>
    %cst = arith.constant 6.28318548 : f32
    %1 = vector.broadcast %cst : f32 to vector<1x8xf32>
    %2 = arith.mulf %0, %1 : vector<1x8xf32>
    %c0_1 = arith.constant 0 : index
    %c0_2 = arith.constant 0 : index
    %3 = vector.load %arg3[%c0_1, %c0_2] : memref<8x32xf32, #tpu.memory_space<vmem>>, vector<8x32xf32>
    %c0_3 = arith.constant 0 : index
    %c0_4 = arith.constant 0 : index
    %4 = vector.load %arg4[%c0_3, %c0_4] : memref<8x32xf32, #tpu.memory_space<vmem>>, vector<8x32xf32>
    %c0_5 = arith.constant 0 : index
    %c0_6 = arith.constant 0 : index
    %5 = vector.load %arg5[%c0_5, %c0_6] : memref<1x32xf32, #tpu.memory_space<vmem>>, vector<1x32xf32>
    %c0_7 = arith.constant 0 : index
    %c0_8 = arith.constant 0 : index
    %6 = vector.load %arg6[%c0_7, %c0_8] : memref<1x32xf32, #tpu.memory_space<vmem>>, vector<1x32xf32>
    %c0_9 = arith.constant 0 : index
    %c0_10 = arith.constant 0 : index
    %7 = vector.load %arg1[%c0_9, %c0_10] : memref<8x4xf32, #tpu.memory_space<vmem>>, vector<8x1xf32>
    %8 = vector.broadcast %7 : vector<8x1xf32> to vector<8x8xf32>
    %9 = vector.broadcast %2 : vector<1x8xf32> to vector<8x8xf32>
    %10 = arith.mulf %8, %9 : vector<8x8xf32>
    %11 = math.sin %10 : vector<8x8xf32>
    %cst_11 = arith.constant dense<0.000000e+00> : vector<8x32xf32>
    %12 = tpu.matmul %11, %3, %cst_11 {dimension_numbers = #tpu.dot_dimension_numbers<[1], [0], [0], [1], [0, 0, 1, 1], [], []>} : vector<8x8xf32>, vector<8x32xf32>, vector<8x32xf32> -> vector<8x32xf32>
    %13 = math.cos %10 : vector<8x8xf32>
    %cst_12 = arith.constant dense<0.000000e+00> : vector<8x32xf32>
    %14 = tpu.matmul %13, %4, %cst_12 {dimension_numbers = #tpu.dot_dimension_numbers<[1], [0], [0], [1], [0, 0, 1, 1], [], []>} : vector<8x8xf32>, vector<8x32xf32>, vector<8x32xf32> -> vector<8x32xf32>
    %15 = arith.addf %12, %14 : vector<8x32xf32>
    %16 = vector.broadcast %7 : vector<8x1xf32> to vector<8x32xf32>
    %17 = vector.broadcast %5 : vector<1x32xf32> to vector<8x32xf32>
    %18 = arith.mulf %16, %17 : vector<8x32xf32>
    %19 = arith.addf %15, %18 : vector<8x32xf32>
    %20 = vector.broadcast %6 : vector<1x32xf32> to vector<8x32xf32>
    %21 = arith.addf %19, %20 : vector<8x32xf32>
    %cst_13 = arith.constant 0.000000e+00 : f32
    %22 = vector.broadcast %cst_13 : f32 to vector<8x32xf32>
    %23 = arith.maximumf %21, %22 : vector<8x32xf32>
    %c0_14 = arith.constant 0 : index
    %c0_15 = arith.constant 0 : index
    %24 = vector.load %arg7[%c0_14, %c0_15] : memref<8x128xf32, #tpu.memory_space<vmem>>, vector<8x32xf32>
    tpu.vector_store %arg7[%c0_14, %c0_15], %23 {strides = array<i32>} : memref<8x128xf32, #tpu.memory_space<vmem>>, vector<8x32xf32>,
    %c0_16 = arith.constant 0 : index
    %c1 = arith.constant 1 : index
    %25 = vector.load %arg1[%c0_16, %c1] : memref<8x4xf32, #tpu.memory_space<vmem>>, vector<8x1xf32>
    %26 = vector.broadcast %25 : vector<8x1xf32> to vector<8x8xf32>
    %27 = vector.broadcast %2 : vector<1x8xf32> to vector<8x8xf32>
    %28 = arith.mulf %26, %27 : vector<8x8xf32>
    %29 = math.sin %28 : vector<8x8xf32>
    %cst_17 = arith.constant dense<0.000000e+00> : vector<8x32xf32>
    %30 = tpu.matmul %29, %3, %cst_17 {dimension_numbers = #tpu.dot_dimension_numbers<[1], [0], [0], [1], [0, 0, 1, 1], [], []>} : vector<8x8xf32>, vector<8x32xf32>, vector<8x32xf32> -> vector<8x32xf32>
    %31 = math.cos %28 : vector<8x8xf32>
    %cst_18 = arith.constant dense<0.000000e+00> : vector<8x32xf32>
    %32 = tpu.matmul %31, %4, %cst_18 {dimension_numbers = #tpu.dot_dimension_numbers<[1], [0], [0], [1], [0, 0, 1, 1], [], []>} : vector<8x8xf32>, vector<8x32xf32>, vector<8x32xf32> -> vector<8x32xf32>
    %33 = arith.addf %30, %32 : vector<8x32xf32>
    %34 = vector.broadcast %25 : vector<8x1xf32> to vector<8x32xf32>
    %35 = vector.broadcast %5 : vector<1x32xf32> to vector<8x32xf32>
    %36 = arith.mulf %34, %35 : vector<8x32xf32>
    %37 = arith.addf %33, %36 : vector<8x32xf32>
    %38 = vector.broadcast %6 : vector<1x32xf32> to vector<8x32xf32>
    %39 = arith.addf %37, %38 : vector<8x32xf32>
    %cst_19 = arith.constant 0.000000e+00 : f32
    %40 = vector.broadcast %cst_19 : f32 to vector<8x32xf32>
    %41 = arith.maximumf %39, %40 : vector<8x32xf32>
    %c0_20 = arith.constant 0 : index
    %c32 = arith.constant 32 : index
    %42 = vector.load %arg7[%c0_20, %c32] : memref<8x128xf32, #tpu.memory_space<vmem>>, vector<8x32xf32>
    tpu.vector_store %arg7[%c0_20, %c32], %41 {strides = array<i32>} : memref<8x128xf32, #tpu.memory_space<vmem>>, vector<8x32xf32>,
    %c0_21 = arith.constant 0 : index
    %c2 = arith.constant 2 : index
    %43 = vector.load %arg1[%c0_21, %c2] : memref<8x4xf32, #tpu.memory_space<vmem>>, vector<8x1xf32>
    %44 = vector.broadcast %43 : vector<8x1xf32> to vector<8x8xf32>
    %45 = vector.broadcast %2 : vector<1x8xf32> to vector<8x8xf32>
    %46 = arith.mulf %44, %45 : vector<8x8xf32>
    %47 = math.sin %46 : vector<8x8xf32>
    %cst_22 = arith.constant dense<0.000000e+00> : vector<8x32xf32>
    %48 = tpu.matmul %47, %3, %cst_22 {dimension_numbers = #tpu.dot_dimension_numbers<[1], [0], [0], [1], [0, 0, 1, 1], [], []>} : vector<8x8xf32>, vector<8x32xf32>, vector<8x32xf32> -> vector<8x32xf32>
    %49 = math.cos %46 : vector<8x8xf32>
    %cst_23 = arith.constant dense<0.000000e+00> : vector<8x32xf32>
    %50 = tpu.matmul %49, %4, %cst_23 {dimension_numbers = #tpu.dot_dimension_numbers<[1], [0], [0], [1], [0, 0, 1, 1], [], []>} : vector<8x8xf32>, vector<8x32xf32>, vector<8x32xf32> -> vector<8x32xf32>
    %51 = arith.addf %48, %50 : vector<8x32xf32>
    %52 = vector.broadcast %43 : vector<8x1xf32> to vector<8x32xf32>
    %53 = vector.broadcast %5 : vector<1x32xf32> to vector<8x32xf32>
    %54 = arith.mulf %52, %53 : vector<8x32xf32>
    %55 = arith.addf %51, %54 : vector<8x32xf32>
    %56 = vector.broadcast %6 : vector<1x32xf32> to vector<8x32xf32>
    %57 = arith.addf %55, %56 : vector<8x32xf32>
    %cst_24 = arith.constant 0.000000e+00 : f32
    %58 = vector.broadcast %cst_24 : f32 to vector<8x32xf32>
    %59 = arith.maximumf %57, %58 : vector<8x32xf32>
    %c0_25 = arith.constant 0 : index
    %c64 = arith.constant 64 : index
    %60 = vector.load %arg7[%c0_25, %c64] : memref<8x128xf32, #tpu.memory_space<vmem>>, vector<8x32xf32>
    tpu.vector_store %arg7[%c0_25, %c64], %59 {strides = array<i32>} : memref<8x128xf32, #tpu.memory_space<vmem>>, vector<8x32xf32>,
    %c0_26 = arith.constant 0 : index
    %c3 = arith.constant 3 : index
    %61 = vector.load %arg1[%c0_26, %c3] : memref<8x4xf32, #tpu.memory_space<vmem>>, vector<8x1xf32>
    %62 = vector.broadcast %61 : vector<8x1xf32> to vector<8x8xf32>
    %63 = vector.broadcast %2 : vector<1x8xf32> to vector<8x8xf32>
    %64 = arith.mulf %62, %63 : vector<8x8xf32>
    %65 = math.sin %64 : vector<8x8xf32>
    %cst_27 = arith.constant dense<0.000000e+00> : vector<8x32xf32>
    %66 = tpu.matmul %65, %3, %cst_27 {dimension_numbers = #tpu.dot_dimension_numbers<[1], [0], [0], [1], [0, 0, 1, 1], [], []>} : vector<8x8xf32>, vector<8x32xf32>, vector<8x32xf32> -> vector<8x32xf32>
    %67 = math.cos %64 : vector<8x8xf32>
    %cst_28 = arith.constant dense<0.000000e+00> : vector<8x32xf32>
    %68 = tpu.matmul %67, %4, %cst_28 {dimension_numbers = #tpu.dot_dimension_numbers<[1], [0], [0], [1], [0, 0, 1, 1], [], []>} : vector<8x8xf32>, vector<8x32xf32>, vector<8x32xf32> -> vector<8x32xf32>
    %69 = arith.addf %66, %68 : vector<8x32xf32>
    %70 = vector.broadcast %61 : vector<8x1xf32> to vector<8x32xf32>
    %71 = vector.broadcast %5 : vector<1x32xf32> to vector<8x32xf32>
    %72 = arith.mulf %70, %71 : vector<8x32xf32>
    %73 = arith.addf %69, %72 : vector<8x32xf32>
    %74 = vector.broadcast %6 : vector<1x32xf32> to vector<8x32xf32>
    %75 = arith.addf %73, %74 : vector<8x32xf32>
    %cst_29 = arith.constant 0.000000e+00 : f32
    %76 = vector.broadcast %cst_29 : f32 to vector<8x32xf32>
    %77 = arith.maximumf %75, %76 : vector<8x32xf32>
    %c0_30 = arith.constant 0 : index
    %c96 = arith.constant 96 : index
    %78 = vector.load %arg7[%c0_30, %c96] : memref<8x128xf32, #tpu.memory_space<vmem>>, vector<8x32xf32>
    tpu.vector_store %arg7[%c0_30, %c96], %77 {strides = array<i32>} : memref<8x128xf32, #tpu.memory_space<vmem>>, vector<8x32xf32>,
    return
  }
  func.func @transform_0(%arg0: i32) -> (i32, i32) {
    %c0_i32 = arith.constant 0 : i32
    %c0_i32_0 = arith.constant 0 : i32
    return %arg0, %c0_i32 : i32, i32
  }
  func.func @transform_1(%arg0: i32) -> (i32, i32) {
    %c0_i32 = arith.constant 0 : i32
    %c0_i32_0 = arith.constant 0 : i32
    %c0_i32_1 = arith.constant 0 : i32
    return %c0_i32, %c0_i32_0 : i32, i32
  }
  func.func @transform_2(%arg0: i32) -> (i32, i32) {
    %c0_i32 = arith.constant 0 : i32
    %c0_i32_0 = arith.constant 0 : i32
    %c0_i32_1 = arith.constant 0 : i32
    return %c0_i32, %c0_i32_0 : i32, i32
  }
  func.func @transform_3(%arg0: i32) -> (i32, i32) {
    %c0_i32 = arith.constant 0 : i32
    %c0_i32_0 = arith.constant 0 : i32
    %c0_i32_1 = arith.constant 0 : i32
    return %c0_i32, %c0_i32_0 : i32, i32
  }
  func.func @transform_4(%arg0: i32) -> (i32, i32) {
    %c0_i32 = arith.constant 0 : i32
    %c0_i32_0 = arith.constant 0 : i32
    %c0_i32_1 = arith.constant 0 : i32
    return %c0_i32, %c0_i32_0 : i32, i32
  }
  func.func @transform_5(%arg0: i32) -> (i32, i32) {
    %c0_i32 = arith.constant 0 : i32
    %c0_i32_0 = arith.constant 0 : i32
    %c0_i32_1 = arith.constant 0 : i32
    return %c0_i32, %c0_i32_0 : i32, i32
  }
  func.func @transform_6(%arg0: i32) -> (i32, i32) {
    %c0_i32 = arith.constant 0 : i32
    %c0_i32_0 = arith.constant 0 : i32
    return %arg0, %c0_i32 : i32, i32
  }
}

</mosaic_0001>

<llo_original>
// kernel: tpu_custom_call.1
$region0: #{tpu_custom_call.1}
  #allocation0 [shape = 'u32[]', space=smem, size = 0x4, offset = 0x4, fixed_abs, tag = 'smem constant byte address 0x4 - core index']
  #allocation1 [shape = 'u32[144,128]{1,0:T(1,128)}', space=vmem, size = 0x12000, scoped, tag = 'internal scratch']
  %s0 = inlined_call_operand.vmem [shape: f32[8,4], index: 0, kind: input, shape index: {}]
  %s1 = inlined_call_operand.vmem [shape: f32[1,8], index: 1, kind: input, shape index: {}]
  %s2 = inlined_call_operand.vmem [shape: f32[8,32], index: 2, kind: input, shape index: {}]
  %s3 = inlined_call_operand.vmem [shape: f32[8,32], index: 3, kind: input, shape index: {}]
  %s4 = inlined_call_operand.vmem [shape: f32[1,32], index: 4, kind: input, shape index: {}]
  %s5 = inlined_call_operand.vmem [shape: f32[1,32], index: 5, kind: input, shape index: {}]
  %s6 = inlined_call_operand.hbm [shape: f32[8,128], index: 6, kind: output, shape index: {}]
  %s7 = sld [smem:[#allocation0]]
  $region34: #{tpu_custom_call.1} parent=0
    _
  %s9 = ssub.s32 1, %s7
  %s10 = scalar_select 0, %s9, %s7
  $region1: #{tpu_custom_call.1} parent=0
    #allocation2 [shape = 'u8[4096]{0}', space=vmem, size = 0x1000, scoped, tag = 'output window, operand 0, single buffered']
    #allocation3 [shape = 's32[1]{0}', space=sflag, size = 0x4, scoped, tag = 'scoped memory for tpu_custom_call.1']
    %11 = vsyncpa [#allocation3], 0
    // Predicated region
    $region2: #{tpu_custom_call.1} parent=1 // pred_check
      _
    $region3: #{tpu_custom_call.1} parent=1 // pred_check_branch
      %13 = sbr.rel (0) target = $region5
    $region4: #{tpu_custom_call.1} parent=1 // pred_region
      _
    $region5: #{tpu_custom_call.1} parent=1 // pred_fallthru
      _
    // Predicated region
    $region6: #{tpu_custom_call.1} parent=1 // pred_check
      _
    $region7: #{tpu_custom_call.1} parent=1 // pred_check_branch
      %15 = sbr.rel (0) target = $region9
    $region8: #{tpu_custom_call.1} parent=1 // pred_region
      _
    $region9: #{tpu_custom_call.1} parent=1 // pred_fallthru
      _
    // Predicated region
    $region10: #{tpu_custom_call.1} parent=1 // pred_check
      _
    $region11: #{tpu_custom_call.1} parent=1 // pred_check_branch
      %17 = sbr.rel (0) target = $region13
    $region12: #{tpu_custom_call.1} parent=1 // pred_region
      _
    $region13: #{tpu_custom_call.1} parent=1 // pred_fallthru
      _
    // Predicated region
    $region14: #{tpu_custom_call.1} parent=1 // pred_check
      _
    $region15: #{tpu_custom_call.1} parent=1 // pred_check_branch
      %19 = sbr.rel (0) target = $region17
    $region16: #{tpu_custom_call.1} parent=1 // pred_region
      _
    $region17: #{tpu_custom_call.1} parent=1 // pred_fallthru
      _
    // Predicated region
    $region18: #{tpu_custom_call.1} parent=1 // pred_check
      _
    $region19: #{tpu_custom_call.1} parent=1 // pred_check_branch
      %21 = sbr.rel (0) target = $region21
    $region20: #{tpu_custom_call.1} parent=1 // pred_region
      _
    $region21: #{tpu_custom_call.1} parent=1 // pred_fallthru
      _
    // Predicated region
    $region22: #{tpu_custom_call.1} parent=1 // pred_check
      _
    $region23: #{tpu_custom_call.1} parent=1 // pred_check_branch
      %23 = sbr.rel (0) target = $region25
    $region24: #{tpu_custom_call.1} parent=1 // pred_region
      _
    $region25: #{tpu_custom_call.1} parent=1 // pred_fallthru
      _
    %v24 = vld [vmem:[%s1] sm:$0x1]
    %v25 = vmul.f32 %v24, 6.2831855
    %v26 = vld [vmem:[%s2] sm:$0xff]
    %v27 = vld [vmem:[%s3] sm:$0xff]
    %v28 = vld [vmem:[%s4] sm:$0x1]
    %v29 = vld [vmem:[%s5] sm:$0x1]
    %v30 = vld [vmem:[%s0] sm:$0xff]
    %32 = vset.pattern.permute.xlu0 0
    %33 = vperm.xlu0 %32, %v30
    %v34 = vpop.permute.xlu0 %33
    %v37 = vlaneseq
    %v38 = vshrl.u32 %v37, 7
    %v39 = vsub.s32 0, %v38
    %v40 = vrot.slane %v25, %v39
    %v42 = vmul.f32 %v34, %v40
    %v43 = vand.u32 2147483647, %v42
    %vm44 = vcmp.le.f32.partialorder %v43, 0.7853982
    %vm45 = vcmp.lt.s32.totalorder %v42, 0
    %v46 = vand.u32 %v42, 2139095040
    %v47 = vshrl.u32 %v46, 23
    %v48 = vsub.s32 %v47, 127
    %v49 = vand.u32 2147483647, %v42
    %v50 = vand.u32 %v49, 8388607
    %v51 = vor.u32 %v50, 8388608
    %v52 = vsub.s32 0, %v51
    %v53 = vadd.s32 %v48, 1
    %vm54 = vcmp.gt.s32.totalorder %v53, 0
    %v55 = vsel %vm54, %v53, 0
    %v56 = vshrl.u32 %v55, 5
    %v57 = vand.u32 %v55, 31
    %v58 = vsub.s32 32, %v57
    %v59 = vshrl.u32 683565275, %v58
    %v60 = vshll.u32 683565275, %v57
    %v61 = vshrl.u32 2475754826, %v58
    %v62 = vor.u32 %v60, %v61
    %v63 = vshll.u32 2475754826, %v57
    %v64 = vshrl.u32 2131351028, %v58
    %v65 = vor.u32 %v63, %v64
    %v66 = vshll.u32 2131351028, %v57
    %v67 = vshrl.u32 2102212464, %v58
    %v68 = vor.u32 %v66, %v67
    %v69 = vshll.u32 2102212464, %v57
    %v70 = vshrl.u32 920167782, %v58
    %v71 = vor.u32 %v69, %v70
    %v72 = vshll.u32 920167782, %v57
    %v73 = vshrl.u32 1326507024, %v58
    %v74 = vor.u32 %v72, %v73
    %vm75 = vcmp.lt.s32.totalorder %v56, 1
    %vm76 = vcmp.lt.s32.totalorder %v56, 2
    %vm77 = vcmp.lt.s32.totalorder %v56, 3
    %vm78 = vcmp.lt.s32.totalorder %v56, 4
    %v79 = vsel %vm75, %v59, %v62
    %v80 = vsel %vm78, %v68, 2102212464
    %v81 = vsel %vm77, %v65, %v80
    %v82 = vsel %vm76, %v79, %v81
    %v83 = vsel %vm75, %v62, %v65
    %v84 = vsel %vm78, %v71, 920167782
    %v85 = vsel %vm77, %v68, %v84
    %v86 = vsel %vm76, %v83, %v85
    %v87 = vsel %vm75, %v65, %v68
    %v88 = vsel %vm78, %v74, 1326507024
    %v89 = vsel %vm77, %v71, %v88
    %v90 = vsel %vm76, %v87, %v89
    %v91 = vshll.u32 %v51, 8
    %v92 = vmul.u32.u64.compose %v91, %v90
    %v93 = vextract.low.u32 %v92
    %v94 = vextract.high.u32 %v92
    %v95 = vmul.u32.u64.compose %v91, %v86
    %v96 = vextract.low.u32 %v95
    %v97 = vextract.high.u32 %v95
    %v98 = vmul.u32 %v91, %v82
    %v99 = vadd.s32 %v94, %v96
    %vm100 = vc.u32 %v94, %v96
    %v101 = vadd.s32 %v97, 1
    %v102 = vsel %vm100, %v101, %v97
    %v103 = vadd.s32 %v98, %v102
    %v104 = vadd.s32 %v103, 536870912
    %v105 = vshrl.u32 %v104, 30
    %v106 = vshll.u32 %v105, 30
    %v107 = vsub.s32 %v103, %v106
    %vm108 = vcmp.lt.s32.totalorder %v107, 0
    %v109 = vsub.s32 0, %v107
    %v110 = vsel %vm108, %v109, %v107
    %v111 = vclz %v110
    %v112 = vsub.s32 %v111, 2
    %vm113 = vcmp.gt.s32.totalorder 0, %v112
    %v114 = vsel %vm113, 0, %v112
    %v115 = vsub.s32 32, %v114
    %v116 = vshll.u32 %v107, %v114
    %v117 = vshrl.u32 %v99, %v115
    %v118 = vor.u32 %v116, %v117
    %v119 = vsub.s32 4294967266, %v114
    %v120 = vadd.s32 %v119, 127
    %v121 = vshll.u32 %v120, 23
    %v122 = vor.u32 4788187, %v121
    %v123 = vand.u32 2147483647, %v122
    %v125 = vcvt.s32.f32 %v118
    %v126 = vmul.f32 %v125, %v123
    %v127 = vxor.u32 %v126, 2147483648
    %v128 = vsel %vm45, %v127, %v126
    %v129 = vsub.s32 4, %v105
    %v130 = vsel %vm45, %v129, %v105
    %v131 = vsel %vm44, %v42, %v128
    %v132 = vsel %vm44, 0, %v130
    %v133 = vcosq.f32.pop %v131
    %v134 = vsinq.f32.pop %v131
    %vm135 = vweird.f32 %v42
    %v136 = vadd.s32 %v132, 3
    %v137 = vand.u32 %v136, 3
    %vm138 = vcmp.lt.s32.totalorder %v137, 2
    %vm139 = vcmp.eq.s32.totalorder %v137, 0
    %v140 = vxor.u32 %v134, 2147483648
    %v141 = vsel %vm139, %v133, %v140
    %vm142 = vcmp.eq.s32.totalorder %v137, 2
    %v143 = vxor.u32 %v133, 2147483648
    %v144 = vsel %vm142, %v143, %v134
    %v145 = vsel %vm138, %v141, %v144
    %v146 = vsel %vm135, nan, %v145
    %v147 = vand.u32 2147483647, %v42
    %vm148 = vcmp.le.f32.partialorder %v147, 0.7853982
    %vm149 = vcmp.lt.s32.totalorder %v42, 0
    %v150 = vand.u32 %v42, 2139095040
    %v151 = vshrl.u32 %v150, 23
    %v152 = vsub.s32 %v151, 127
    %v153 = vand.u32 2147483647, %v42
    %v154 = vand.u32 %v153, 8388607
    %v155 = vor.u32 %v154, 8388608
    %v156 = vsub.s32 0, %v155
    %v157 = vadd.s32 %v152, 1
    %vm158 = vcmp.gt.s32.totalorder %v157, 0
    %v159 = vsel %vm158, %v157, 0
    %v160 = vshrl.u32 %v159, 5
    %v161 = vand.u32 %v159, 31
    %v162 = vsub.s32 32, %v161
    %v163 = vshrl.u32 683565275, %v162
    %v164 = vshll.u32 683565275, %v161
    %v165 = vshrl.u32 2475754826, %v162
    %v166 = vor.u32 %v164, %v165
    %v167 = vshll.u32 2475754826, %v161
    %v168 = vshrl.u32 2131351028, %v162
    %v169 = vor.u32 %v167, %v168
    %v170 = vshll.u32 2131351028, %v161
    %v171 = vshrl.u32 2102212464, %v162
    %v172 = vor.u32 %v170, %v171
    %v173 = vshll.u32 2102212464, %v161
    %v174 = vshrl.u32 920167782, %v162
    %v175 = vor.u32 %v173, %v174
    %v176 = vshll.u32 920167782, %v161
    %v177 = vshrl.u32 1326507024, %v162
    %v178 = vor.u32 %v176, %v177
    %vm179 = vcmp.lt.s32.totalorder %v160, 1
    %vm180 = vcmp.lt.s32.totalorder %v160, 2
    %vm181 = vcmp.lt.s32.totalorder %v160, 3
    %vm182 = vcmp.lt.s32.totalorder %v160, 4
    %v183 = vsel %vm179, %v163, %v166
    %v184 = vsel %vm182, %v172, 2102212464
    %v185 = vsel %vm181, %v169, %v184
    %v186 = vsel %vm180, %v183, %v185
    %v187 = vsel %vm179, %v166, %v169
    %v188 = vsel %vm182, %v175, 920167782
    %v189 = vsel %vm181, %v172, %v188
    %v190 = vsel %vm180, %v187, %v189
    %v191 = vsel %vm179, %v169, %v172
    %v192 = vsel %vm182, %v178, 1326507024
    %v193 = vsel %vm181, %v175, %v192
    %v194 = vsel %vm180, %v191, %v193
    %v195 = vshll.u32 %v155, 8
    %v196 = vmul.u32.u64.compose %v195, %v194
    %v197 = vextract.low.u32 %v196
    %v198 = vextract.high.u32 %v196
    %v199 = vmul.u32.u64.compose %v195, %v190
    %v200 = vextract.low.u32 %v199
    %v201 = vextract.high.u32 %v199
    %v202 = vmul.u32 %v195, %v186
    %v203 = vadd.s32 %v198, %v200
    %vm204 = vc.u32 %v198, %v200
    %v205 = vadd.s32 %v201, 1
    %v206 = vsel %vm204, %v205, %v201
    %v207 = vadd.s32 %v202, %v206
    %v208 = vadd.s32 %v207, 536870912
    %v209 = vshrl.u32 %v208, 30
    %v210 = vshll.u32 %v209, 30
    %v211 = vsub.s32 %v207, %v210
    %vm212 = vcmp.lt.s32.totalorder %v211, 0
    %v213 = vsub.s32 0, %v211
    %v214 = vsel %vm212, %v213, %v211
    %v215 = vclz %v214
    %v216 = vsub.s32 %v215, 2
    %vm217 = vcmp.gt.s32.totalorder 0, %v216
    %v218 = vsel %vm217, 0, %v216
    %v219 = vsub.s32 32, %v218
    %v220 = vshll.u32 %v211, %v218
    %v221 = vshrl.u32 %v203, %v219
    %v222 = vor.u32 %v220, %v221
    %v223 = vsub.s32 4294967266, %v218
    %v224 = vadd.s32 %v223, 127
    %v225 = vshll.u32 %v224, 23
    %v226 = vor.u32 4788187, %v225
    %v227 = vand.u32 2147483647, %v226
    %v229 = vcvt.s32.f32 %v222
    %v230 = vmul.f32 %v229, %v227
    %v231 = vxor.u32 %v230, 2147483648
    %v232 = vsel %vm149, %v231, %v230
    %v233 = vsub.s32 4, %v209
    %v234 = vsel %vm149, %v233, %v209
    %v235 = vsel %vm148, %v42, %v232
    %v236 = vsel %vm148, 0, %v234
    %v237 = vcosq.f32.pop %v235
    %v238 = vsinq.f32.pop %v235
    %vm239 = vweird.f32 %v42
    %v240 = vand.u32 %v236, 3
    %vm241 = vcmp.lt.s32.totalorder %v240, 2
    %vm242 = vcmp.eq.s32.totalorder %v240, 0
    %v243 = vxor.u32 %v238, 2147483648
    %v244 = vsel %vm242, %v237, %v243
    %vm245 = vcmp.eq.s32.totalorder %v240, 2
    %v246 = vxor.u32 %v237, 2147483648
    %v247 = vsel %vm245, %v246, %v238
    %v248 = vsel %vm241, %v244, %v247
    %v249 = vsel %vm239, nan, %v248
    %vm250 = vcmask 64512
    %v252 = vsel %vm250, %v249, 0
    %254 = vmatprep.subr.mxu0 0.0
    %255 = vmatpush1.msra.mxu0 0.0
    %256 = vmatprep.subr.mxu0 0.0
    %257 = vmatpush1.msra.mxu0 0.0
    %258 = vmatprep.subr.mxu0 0.0
    %259 = vmatpush1.msra.mxu0 0.0
    %260 = vmatprep.subr.mxu0 0.0
    %261 = vmatpush1.msra.mxu0 0.0
    %262 = vmatprep.subr.mxu0 0.0
    %263 = vmatpush1.msra.mxu0 0.0
    %264 = vmatprep.subr.mxu0 0.0
    %265 = vmatpush1.msra.mxu0 0.0
    %266 = vmatprep.subr.mxu0 0.0
    %267 = vmatpush1.msra.mxu0 0.0
    %268 = vmatprep.subr.mxu0 0.0
    %269 = vmatpush1.msra.mxu0 0.0
    %270 = vmatprep.subr.mxu0 0.0
    %271 = vmatpush1.msra.mxu0 0.0
    %272 = vmatprep.subr.mxu0 0.0
    %273 = vmatpush1.msra.mxu0 0.0
    %274 = vmatprep.subr.mxu0 0.0
    %275 = vmatpush1.msra.mxu0 0.0
    %276 = vmatprep.subr.mxu0 0.0
    %277 = vmatpush1.msra.mxu0 0.0
    %278 = vmatprep.subr.mxu0 0.0
    %279 = vmatpush1.msra.mxu0 0.0
    %280 = vmatprep.subr.mxu0 0.0
    %281 = vmatpush1.msra.mxu0 0.0
    %282 = vmatprep.subr.mxu0 0.0
    %283 = vmatpush1.msra.mxu0 0.0
    %284 = vmatprep.subr.mxu0 0.0
    %285 = vmatpush1.msra.mxu0 %v27
    %286 = vmatprep.subr.mxu0 0.0
    %287 = vmatpush2.msra.mxu0 0.0
    %288 = vmatprep.subr.mxu0 0.0
    %289 = vmatpush2.msra.mxu0 0.0
    %290 = vmatprep.subr.mxu0 0.0
    %291 = vmatpush2.msra.mxu0 0.0
    %292 = vmatprep.subr.mxu0 0.0
    %293 = vmatpush2.msra.mxu0 0.0
    %294 = vmatprep.subr.mxu0 0.0
    %295 = vmatpush2.msra.mxu0 0.0
    %296 = vmatprep.subr.mxu0 0.0
    %297 = vmatpush2.msra.mxu0 0.0
    %298 = vmatprep.subr.mxu0 0.0
    %299 = vmatpush2.msra.mxu0 0.0
    %300 = vmatprep.subr.mxu0 0.0
    %301 = vmatpush2.msra.mxu0 0.0
    %302 = vmatprep.subr.mxu0 0.0
    %303 = vmatpush2.msra.mxu0 0.0
    %304 = vmatprep.subr.mxu0 0.0
    %305 = vmatpush2.msra.mxu0 0.0
    %306 = vmatprep.subr.mxu0 0.0
    %307 = vmatpush2.msra.mxu0 0.0
    %308 = vmatprep.subr.mxu0 0.0
    %309 = vmatpush2.msra.mxu0 0.0
    %310 = vmatprep.subr.mxu0 0.0
    %311 = vmatpush2.msra.mxu0 0.0
    %312 = vmatprep.subr.mxu0 0.0
    %313 = vmatpush2.msra.mxu0 0.0
    %314 = vmatprep.subr.mxu0 0.0
    %315 = vmatpush2.msra.mxu0 0.0
    %316 = vmatprep.subr.mxu0 0.0
    %317 = vmatpush2.msra.mxu0 0.0
    %318 = vmatprep.mubr.f32.mxu0 0.0
    %319 = vmatmul.mubr.f32.gmra.mxu0 %v252
    %v320 = vpop.f32.mrf.mxu0
    %v321 = vadd.f32 0.0, %v320
    %v322 = vpop.f32.mrf.mxu0
    %323 = vdwg.mxu0
    %v325 = vsel %vm250, %v146, 0
    %327 = vmatprep.subr.mxu0 0.0
    %328 = vmatpush1.msra.mxu0 0.0
    %329 = vmatprep.subr.mxu0 0.0
    %330 = vmatpush1.msra.mxu0 0.0
    %331 = vmatprep.subr.mxu0 0.0
    %332 = vmatpush1.msra.mxu0 0.0
    %333 = vmatprep.subr.mxu0 0.0
    %334 = vmatpush1.msra.mxu0 0.0
    %335 = vmatprep.subr.mxu0 0.0
    %336 = vmatpush1.msra.mxu0 0.0
    %337 = vmatprep.subr.mxu0 0.0
    %338 = vmatpush1.msra.mxu0 0.0
    %339 = vmatprep.subr.mxu0 0.0
    %340 = vmatpush1.msra.mxu0 0.0
    %341 = vmatprep.subr.mxu0 0.0
    %342 = vmatpush1.msra.mxu0 0.0
    %343 = vmatprep.subr.mxu0 0.0
    %344 = vmatpush1.msra.mxu0 0.0
    %345 = vmatprep.subr.mxu0 0.0
    %346 = vmatpush1.msra.mxu0 0.0
    %347 = vmatprep.subr.mxu0 0.0
    %348 = vmatpush1.msra.mxu0 0.0
    %349 = vmatprep.subr.mxu0 0.0
    %350 = vmatpush1.msra.mxu0 0.0
    %351 = vmatprep.subr.mxu0 0.0
    %352 = vmatpush1.msra.mxu0 0.0
    %353 = vmatprep.subr.mxu0 0.0
    %354 = vmatpush1.msra.mxu0 0.0
    %355 = vmatprep.subr.mxu0 0.0
    %356 = vmatpush1.msra.mxu0 0.0
    %357 = vmatprep.subr.mxu0 0.0
    %358 = vmatpush1.msra.mxu0 %v26
    %359 = vmatprep.subr.mxu0 0.0
    %360 = vmatpush2.msra.mxu0 0.0
    %361 = vmatprep.subr.mxu0 0.0
    %362 = vmatpush2.msra.mxu0 0.0
    %363 = vmatprep.subr.mxu0 0.0
    %364 = vmatpush2.msra.mxu0 0.0
    %365 = vmatprep.subr.mxu0 0.0
    %366 = vmatpush2.msra.mxu0 0.0
    %367 = vmatprep.subr.mxu0 0.0
    %368 = vmatpush2.msra.mxu0 0.0
    %369 = vmatprep.subr.mxu0 0.0
    %370 = vmatpush2.msra.mxu0 0.0
    %371 = vmatprep.subr.mxu0 0.0
    %372 = vmatpush2.msra.mxu0 0.0
    %373 = vmatprep.subr.mxu0 0.0
    %374 = vmatpush2.msra.mxu0 0.0
    %375 = vmatprep.subr.mxu0 0.0
    %376 = vmatpush2.msra.mxu0 0.0
    %377 = vmatprep.subr.mxu0 0.0
    %378 = vmatpush2.msra.mxu0 0.0
    %379 = vmatprep.subr.mxu0 0.0
    %380 = vmatpush2.msra.mxu0 0.0
    %381 = vmatprep.subr.mxu0 0.0
    %382 = vmatpush2.msra.mxu0 0.0
    %383 = vmatprep.subr.mxu0 0.0
    %384 = vmatpush2.msra.mxu0 0.0
    %385 = vmatprep.subr.mxu0 0.0
    %386 = vmatpush2.msra.mxu0 0.0
    %387 = vmatprep.subr.mxu0 0.0
    %388 = vmatpush2.msra.mxu0 0.0
    %389 = vmatprep.subr.mxu0 0.0
    %390 = vmatpush2.msra.mxu0 0.0
    %391 = vmatprep.mubr.f32.mxu0 0.0
    %392 = vmatmul.mubr.f32.gmra.mxu0 %v325
    %v393 = vpop.f32.mrf.mxu0
    %v394 = vadd.f32 %v321, %v393
    %v395 = vpop.f32.mrf.mxu0
    %396 = vdwg.mxu0
    %v398 = vlaneseq
    %v399 = vshrl.u32 %v398, 7
    %v400 = vsub.s32 0, %v399
    %v401 = vrot.slane %v28, %v400
    %v403 = vmul.f32 %v34, %v401
    %v404 = vadd.f32 %v394, %v403
    %v406 = vlaneseq
    %v407 = vshrl.u32 %v406, 7
    %v408 = vsub.s32 0, %v407
    %v409 = vrot.slane %v29, %v408
    %v411 = vadd.f32 %v404, %v409
    %v412 = vmax.f32 %v411, 0.0
    %vm413 = vcmask 261120
    %414 = vst.msk [vmem:[#allocation2] sm:$0xff] %vm413, %v412
    %v415 = vld [vmem:[%s0] sm:$0xff]
    %417 = vset.pattern.permute.xlu0 1
    %418 = vperm.xlu0 %417, %v415
    %v419 = vpop.permute.xlu0 %418
    %v421 = vmul.f32 %v419, %v40
    %v422 = vand.u32 2147483647, %v421
    %vm423 = vcmp.le.f32.partialorder %v422, 0.7853982
    %vm424 = vcmp.lt.s32.totalorder %v421, 0
    %v425 = vand.u32 %v421, 2139095040
    %v426 = vshrl.u32 %v425, 23
    %v427 = vsub.s32 %v426, 127
    %v428 = vand.u32 2147483647, %v421
    %v429 = vand.u32 %v428, 8388607
    %v430 = vor.u32 %v429, 8388608
    %v431 = vsub.s32 0, %v430
    %v432 = vadd.s32 %v427, 1
    %vm433 = vcmp.gt.s32.totalorder %v432, 0
    %v434 = vsel %vm433, %v432, 0
    %v435 = vshrl.u32 %v434, 5
    %v436 = vand.u32 %v434, 31
    %v437 = vsub.s32 32, %v436
    %v438 = vshrl.u32 683565275, %v437
    %v439 = vshll.u32 683565275, %v436
    %v440 = vshrl.u32 2475754826, %v437
    %v441 = vor.u32 %v439, %v440
    %v442 = vshll.u32 2475754826, %v436
    %v443 = vshrl.u32 2131351028, %v437
    %v444 = vor.u32 %v442, %v443
    %v445 = vshll.u32 2131351028, %v436
    %v446 = vshrl.u32 2102212464, %v437
    %v447 = vor.u32 %v445, %v446
    %v448 = vshll.u32 2102212464, %v436
    %v449 = vshrl.u32 920167782, %v437
    %v450 = vor.u32 %v448, %v449
    %v451 = vshll.u32 920167782, %v436
    %v452 = vshrl.u32 1326507024, %v437
    %v453 = vor.u32 %v451, %v452
    %vm454 = vcmp.lt.s32.totalorder %v435, 1
    %vm455 = vcmp.lt.s32.totalorder %v435, 2
    %vm456 = vcmp.lt.s32.totalorder %v435, 3
    %vm457 = vcmp.lt.s32.totalorder %v435, 4
    %v458 = vsel %vm454, %v438, %v441
    %v459 = vsel %vm457, %v447, 2102212464
    %v460 = vsel %vm456, %v444, %v459
    %v461 = vsel %vm455, %v458, %v460
    %v462 = vsel %vm454, %v441, %v444
    %v463 = vsel %vm457, %v450, 920167782
    %v464 = vsel %vm456, %v447, %v463
    %v465 = vsel %vm455, %v462, %v464
    %v466 = vsel %vm454, %v444, %v447
    %v467 = vsel %vm457, %v453, 1326507024
    %v468 = vsel %vm456, %v450, %v467
    %v469 = vsel %vm455, %v466, %v468
    %v470 = vshll.u32 %v430, 8
    %v471 = vmul.u32.u64.compose %v470, %v469
    %v472 = vextract.low.u32 %v471
    %v473 = vextract.high.u32 %v471
    %v474 = vmul.u32.u64.compose %v470, %v465
    %v475 = vextract.low.u32 %v474
    %v476 = vextract.high.u32 %v474
    %v477 = vmul.u32 %v470, %v461
    %v478 = vadd.s32 %v473, %v475
    %vm479 = vc.u32 %v473, %v475
    %v480 = vadd.s32 %v476, 1
    %v481 = vsel %vm479, %v480, %v476
    %v482 = vadd.s32 %v477, %v481
    %v483 = vadd.s32 %v482, 536870912
    %v484 = vshrl.u32 %v483, 30
    %v485 = vshll.u32 %v484, 30
    %v486 = vsub.s32 %v482, %v485
    %vm487 = vcmp.lt.s32.totalorder %v486, 0
    %v488 = vsub.s32 0, %v486
    %v489 = vsel %vm487, %v488, %v486
    %v490 = vclz %v489
    %v491 = vsub.s32 %v490, 2
    %vm492 = vcmp.gt.s32.totalorder 0, %v491
    %v493 = vsel %vm492, 0, %v491
    %v494 = vsub.s32 32, %v493
    %v495 = vshll.u32 %v486, %v493
    %v496 = vshrl.u32 %v478, %v494
    %v497 = vor.u32 %v495, %v496
    %v498 = vsub.s32 4294967266, %v493
    %v499 = vadd.s32 %v498, 127
    %v500 = vshll.u32 %v499, 23
    %v501 = vor.u32 4788187, %v500
    %v502 = vand.u32 2147483647, %v501
    %v504 = vcvt.s32.f32 %v497
    %v505 = vmul.f32 %v504, %v502
    %v506 = vxor.u32 %v505, 2147483648
    %v507 = vsel %vm424, %v506, %v505
    %v508 = vsub.s32 4, %v484
    %v509 = vsel %vm424, %v508, %v484
    %v510 = vsel %vm423, %v421, %v507
    %v511 = vsel %vm423, 0, %v509
    %v512 = vcosq.f32.pop %v510
    %v513 = vsinq.f32.pop %v510
    %vm514 = vweird.f32 %v421
    %v515 = vadd.s32 %v511, 3
    %v516 = vand.u32 %v515, 3
    %vm517 = vcmp.lt.s32.totalorder %v516, 2
    %vm518 = vcmp.eq.s32.totalorder %v516, 0
    %v519 = vxor.u32 %v513, 2147483648
    %v520 = vsel %vm518, %v512, %v519
    %vm521 = vcmp.eq.s32.totalorder %v516, 2
    %v522 = vxor.u32 %v512, 2147483648
    %v523 = vsel %vm521, %v522, %v513
    %v524 = vsel %vm517, %v520, %v523
    %v525 = vsel %vm514, nan, %v524
    %v526 = vand.u32 2147483647, %v421
    %vm527 = vcmp.le.f32.partialorder %v526, 0.7853982
    %vm528 = vcmp.lt.s32.totalorder %v421, 0
    %v529 = vand.u32 %v421, 2139095040
    %v530 = vshrl.u32 %v529, 23
    %v531 = vsub.s32 %v530, 127
    %v532 = vand.u32 2147483647, %v421
    %v533 = vand.u32 %v532, 8388607
    %v534 = vor.u32 %v533, 8388608
    %v535 = vsub.s32 0, %v534
    %v536 = vadd.s32 %v531, 1
    %vm537 = vcmp.gt.s32.totalorder %v536, 0
    %v538 = vsel %vm537, %v536, 0
    %v539 = vshrl.u32 %v538, 5
    %v540 = vand.u32 %v538, 31
    %v541 = vsub.s32 32, %v540
    %v542 = vshrl.u32 683565275, %v541
    %v543 = vshll.u32 683565275, %v540
    %v544 = vshrl.u32 2475754826, %v541
    %v545 = vor.u32 %v543, %v544
    %v546 = vshll.u32 2475754826, %v540
    %v547 = vshrl.u32 2131351028, %v541
    %v548 = vor.u32 %v546, %v547
    %v549 = vshll.u32 2131351028, %v540
    %v550 = vshrl.u32 2102212464, %v541
    %v551 = vor.u32 %v549, %v550
    %v552 = vshll.u32 2102212464, %v540
    %v553 = vshrl.u32 920167782, %v541
    %v554 = vor.u32 %v552, %v553
    %v555 = vshll.u32 920167782, %v540
    %v556 = vshrl.u32 1326507024, %v541
    %v557 = vor.u32 %v555, %v556
    %vm558 = vcmp.lt.s32.totalorder %v539, 1
    %vm559 = vcmp.lt.s32.totalorder %v539, 2
    %vm560 = vcmp.lt.s32.totalorder %v539, 3
    %vm561 = vcmp.lt.s32.totalorder %v539, 4
    %v562 = vsel %vm558, %v542, %v545
    %v563 = vsel %vm561, %v551, 2102212464
    %v564 = vsel %vm560, %v548, %v563
    %v565 = vsel %vm559, %v562, %v564
    %v566 = vsel %vm558, %v545, %v548
    %v567 = vsel %vm561, %v554, 920167782
    %v568 = vsel %vm560, %v551, %v567
    %v569 = vsel %vm559, %v566, %v568
    %v570 = vsel %vm558, %v548, %v551
    %v571 = vsel %vm561, %v557, 1326507024
    %v572 = vsel %vm560, %v554, %v571
    %v573 = vsel %vm559, %v570, %v572
    %v574 = vshll.u32 %v534, 8
    %v575 = vmul.u32.u64.compose %v574, %v573
    %v576 = vextract.low.u32 %v575
    %v577 = vextract.high.u32 %v575
    %v578 = vmul.u32.u64.compose %v574, %v569
    %v579 = vextract.low.u32 %v578
    %v580 = vextract.high.u32 %v578
    %v581 = vmul.u32 %v574, %v565
    %v582 = vadd.s32 %v577, %v579
    %vm583 = vc.u32 %v577, %v579
    %v584 = vadd.s32 %v580, 1
    %v585 = vsel %vm583, %v584, %v580
    %v586 = vadd.s32 %v581, %v585
    %v587 = vadd.s32 %v586, 536870912
    %v588 = vshrl.u32 %v587, 30
    %v589 = vshll.u32 %v588, 30
    %v590 = vsub.s32 %v586, %v589
    %vm591 = vcmp.lt.s32.totalorder %v590, 0
    %v592 = vsub.s32 0, %v590
    %v593 = vsel %vm591, %v592, %v590
    %v594 = vclz %v593
    %v595 = vsub.s32 %v594, 2
    %vm596 = vcmp.gt.s32.totalorder 0, %v595
    %v597 = vsel %vm596, 0, %v595
    %v598 = vsub.s32 32, %v597
    %v599 = vshll.u32 %v590, %v597
    %v600 = vshrl.u32 %v582, %v598
    %v601 = vor.u32 %v599, %v600
    %v602 = vsub.s32 4294967266, %v597
    %v603 = vadd.s32 %v602, 127
    %v604 = vshll.u32 %v603, 23
    %v605 = vor.u32 4788187, %v604
    %v606 = vand.u32 2147483647, %v605
    %v608 = vcvt.s32.f32 %v601
    %v609 = vmul.f32 %v608, %v606
    %v610 = vxor.u32 %v609, 2147483648
    %v611 = vsel %vm528, %v610, %v609
    %v612 = vsub.s32 4, %v588
    %v613 = vsel %vm528, %v612, %v588
    %v614 = vsel %vm527, %v421, %v611
    %v615 = vsel %vm527, 0, %v613
    %v616 = vcosq.f32.pop %v614
    %v617 = vsinq.f32.pop %v614
    %vm618 = vweird.f32 %v421
    %v619 = vand.u32 %v615, 3
    %vm620 = vcmp.lt.s32.totalorder %v619, 2
    %vm621 = vcmp.eq.s32.totalorder %v619, 0
    %v622 = vxor.u32 %v617, 2147483648
    %v623 = vsel %vm621, %v616, %v622
    %vm624 = vcmp.eq.s32.totalorder %v619, 2
    %v625 = vxor.u32 %v616, 2147483648
    %v626 = vsel %vm624, %v625, %v617
    %v627 = vsel %vm620, %v623, %v626
    %v628 = vsel %vm618, nan, %v627
    %v630 = vsel %vm250, %v628, 0
    %632 = vmatprep.subr.mxu0 0.0
    %633 = vmatpush1.msra.mxu0 0.0
    %634 = vmatprep.subr.mxu0 0.0
    %635 = vmatpush1.msra.mxu0 0.0
    %636 = vmatprep.subr.mxu0 0.0
    %637 = vmatpush1.msra.mxu0 0.0
    %638 = vmatprep.subr.mxu0 0.0
    %639 = vmatpush1.msra.mxu0 0.0
    %640 = vmatprep.subr.mxu0 0.0
    %641 = vmatpush1.msra.mxu0 0.0
    %642 = vmatprep.subr.mxu0 0.0
    %643 = vmatpush1.msra.mxu0 0.0
    %644 = vmatprep.subr.mxu0 0.0
    %645 = vmatpush1.msra.mxu0 0.0
    %646 = vmatprep.subr.mxu0 0.0
    %647 = vmatpush1.msra.mxu0 0.0
    %648 = vmatprep.subr.mxu0 0.0
    %649 = vmatpush1.msra.mxu0 0.0
    %650 = vmatprep.subr.mxu0 0.0
    %651 = vmatpush1.msra.mxu0 0.0
    %652 = vmatprep.subr.mxu0 0.0
    %653 = vmatpush1.msra.mxu0 0.0
    %654 = vmatprep.subr.mxu0 0.0
    %655 = vmatpush1.msra.mxu0 0.0
    %656 = vmatprep.subr.mxu0 0.0
    %657 = vmatpush1.msra.mxu0 0.0
    %658 = vmatprep.subr.mxu0 0.0
    %659 = vmatpush1.msra.mxu0 0.0
    %660 = vmatprep.subr.mxu0 0.0
    %661 = vmatpush1.msra.mxu0 0.0
    %662 = vmatprep.subr.mxu0 0.0
    %663 = vmatpush1.msra.mxu0 %v27
    %664 = vmatprep.subr.mxu0 0.0
    %665 = vmatpush2.msra.mxu0 0.0
    %666 = vmatprep.subr.mxu0 0.0
    %667 = vmatpush2.msra.mxu0 0.0
    %668 = vmatprep.subr.mxu0 0.0
    %669 = vmatpush2.msra.mxu0 0.0
    %670 = vmatprep.subr.mxu0 0.0
    %671 = vmatpush2.msra.mxu0 0.0
    %672 = vmatprep.subr.mxu0 0.0
    %673 = vmatpush2.msra.mxu0 0.0
    %674 = vmatprep.subr.mxu0 0.0
    %675 = vmatpush2.msra.mxu0 0.0
    %676 = vmatprep.subr.mxu0 0.0
    %677 = vmatpush2.msra.mxu0 0.0
    %678 = vmatprep.subr.mxu0 0.0
    %679 = vmatpush2.msra.mxu0 0.0
    %680 = vmatprep.subr.mxu0 0.0
    %681 = vmatpush2.msra.mxu0 0.0
    %682 = vmatprep.subr.mxu0 0.0
    %683 = vmatpush2.msra.mxu0 0.0
    %684 = vmatprep.subr.mxu0 0.0
    %685 = vmatpush2.msra.mxu0 0.0
    %686 = vmatprep.subr.mxu0 0.0
    %687 = vmatpush2.msra.mxu0 0.0
    %688 = vmatprep.subr.mxu0 0.0
    %689 = vmatpush2.msra.mxu0 0.0
    %690 = vmatprep.subr.mxu0 0.0
    %691 = vmatpush2.msra.mxu0 0.0
    %692 = vmatprep.subr.mxu0 0.0
    %693 = vmatpush2.msra.mxu0 0.0
    %694 = vmatprep.subr.mxu0 0.0
    %695 = vmatpush2.msra.mxu0 0.0
    %696 = vmatprep.mubr.f32.mxu0 0.0
    %697 = vmatmul.mubr.f32.gmra.mxu0 %v630
    %v698 = vpop.f32.mrf.mxu0
    %v699 = vadd.f32 0.0, %v698
    %v700 = vpop.f32.mrf.mxu0
    %701 = vdwg.mxu0
    %v703 = vsel %vm250, %v525, 0
    %705 = vmatprep.subr.mxu0 0.0
    %706 = vmatpush1.msra.mxu0 0.0
    %707 = vmatprep.subr.mxu0 0.0
    %708 = vmatpush1.msra.mxu0 0.0
    %709 = vmatprep.subr.mxu0 0.0
    %710 = vmatpush1.msra.mxu0 0.0
    %711 = vmatprep.subr.mxu0 0.0
    %712 = vmatpush1.msra.mxu0 0.0
    %713 = vmatprep.subr.mxu0 0.0
    %714 = vmatpush1.msra.mxu0 0.0
    %715 = vmatprep.subr.mxu0 0.0
    %716 = vmatpush1.msra.mxu0 0.0
    %717 = vmatprep.subr.mxu0 0.0
    %718 = vmatpush1.msra.mxu0 0.0
    %719 = vmatprep.subr.mxu0 0.0
    %720 = vmatpush1.msra.mxu0 0.0
    %721 = vmatprep.subr.mxu0 0.0
    %722 = vmatpush1.msra.mxu0 0.0
    %723 = vmatprep.subr.mxu0 0.0
    %724 = vmatpush1.msra.mxu0 0.0
    %725 = vmatprep.subr.mxu0 0.0
    %726 = vmatpush1.msra.mxu0 0.0
    %727 = vmatprep.subr.mxu0 0.0
    %728 = vmatpush1.msra.mxu0 0.0
    %729 = vmatprep.subr.mxu0 0.0
    %730 = vmatpush1.msra.mxu0 0.0
    %731 = vmatprep.subr.mxu0 0.0
    %732 = vmatpush1.msra.mxu0 0.0
    %733 = vmatprep.subr.mxu0 0.0
    %734 = vmatpush1.msra.mxu0 0.0
    %735 = vmatprep.subr.mxu0 0.0
    %736 = vmatpush1.msra.mxu0 %v26
    %737 = vmatprep.subr.mxu0 0.0
    %738 = vmatpush2.msra.mxu0 0.0
    %739 = vmatprep.subr.mxu0 0.0
    %740 = vmatpush2.msra.mxu0 0.0
    %741 = vmatprep.subr.mxu0 0.0
    %742 = vmatpush2.msra.mxu0 0.0
    %743 = vmatprep.subr.mxu0 0.0
    %744 = vmatpush2.msra.mxu0 0.0
    %745 = vmatprep.subr.mxu0 0.0
    %746 = vmatpush2.msra.mxu0 0.0
    %747 = vmatprep.subr.mxu0 0.0
    %748 = vmatpush2.msra.mxu0 0.0
    %749 = vmatprep.subr.mxu0 0.0
    %750 = vmatpush2.msra.mxu0 0.0
    %751 = vmatprep.subr.mxu0 0.0
    %752 = vmatpush2.msra.mxu0 0.0
    %753 = vmatprep.subr.mxu0 0.0
    %754 = vmatpush2.msra.mxu0 0.0
    %755 = vmatprep.subr.mxu0 0.0
    %756 = vmatpush2.msra.mxu0 0.0
    %757 = vmatprep.subr.mxu0 0.0
    %758 = vmatpush2.msra.mxu0 0.0
    %759 = vmatprep.subr.mxu0 0.0
    %760 = vmatpush2.msra.mxu0 0.0
    %761 = vmatprep.subr.mxu0 0.0
    %762 = vmatpush2.msra.mxu0 0.0
    %763 = vmatprep.subr.mxu0 0.0
    %764 = vmatpush2.msra.mxu0 0.0
    %765 = vmatprep.subr.mxu0 0.0
    %766 = vmatpush2.msra.mxu0 0.0
    %767 = vmatprep.subr.mxu0 0.0
    %768 = vmatpush2.msra.mxu0 0.0
    %769 = vmatprep.mubr.f32.mxu0 0.0
    %770 = vmatmul.mubr.f32.gmra.mxu0 %v703
    %v771 = vpop.f32.mrf.mxu0
    %v772 = vadd.f32 %v699, %v771
    %v773 = vpop.f32.mrf.mxu0
    %774 = vdwg.mxu0
    %v775 = vmul.f32 %v419, %v401
    %v776 = vadd.f32 %v772, %v775
    %v777 = vadd.f32 %v776, %v409
    %v778 = vmax.f32 %v777, 0.0
    %780 = vrot.lane.b32.xlu0 %v778, 32
    %v781 = vpop.permute.xlu0 %780
    %vm783 = vcmask 523520
    %784 = vst.msk [vmem:[#allocation2] sm:$0xff] %vm783, %v781
    %v785 = vld [vmem:[%s0] sm:$0xff]
    %787 = vset.pattern.permute.xlu0 2
    %788 = vperm.xlu0 %787, %v785
    %v789 = vpop.permute.xlu0 %788
    %v791 = vmul.f32 %v789, %v40
    %v792 = vand.u32 2147483647, %v791
    %vm793 = vcmp.le.f32.partialorder %v792, 0.7853982
    %vm794 = vcmp.lt.s32.totalorder %v791, 0
    %v795 = vand.u32 %v791, 2139095040
    %v796 = vshrl.u32 %v795, 23
    %v797 = vsub.s32 %v796, 127
    %v798 = vand.u32 2147483647, %v791
    %v799 = vand.u32 %v798, 8388607
    %v800 = vor.u32 %v799, 8388608
    %v801 = vsub.s32 0, %v800
    %v802 = vadd.s32 %v797, 1
    %vm803 = vcmp.gt.s32.totalorder %v802, 0
    %v804 = vsel %vm803, %v802, 0
    %v805 = vshrl.u32 %v804, 5
    %v806 = vand.u32 %v804, 31
    %v807 = vsub.s32 32, %v806
    %v808 = vshrl.u32 683565275, %v807
    %v809 = vshll.u32 683565275, %v806
    %v810 = vshrl.u32 2475754826, %v807
    %v811 = vor.u32 %v809, %v810
    %v812 = vshll.u32 2475754826, %v806
    %v813 = vshrl.u32 2131351028, %v807
    %v814 = vor.u32 %v812, %v813
    %v815 = vshll.u32 2131351028, %v806
    %v816 = vshrl.u32 2102212464, %v807
    %v817 = vor.u32 %v815, %v816
    %v818 = vshll.u32 2102212464, %v806
    %v819 = vshrl.u32 920167782, %v807
    %v820 = vor.u32 %v818, %v819
    %v821 = vshll.u32 920167782, %v806
    %v822 = vshrl.u32 1326507024, %v807
    %v823 = vor.u32 %v821, %v822
    %vm824 = vcmp.lt.s32.totalorder %v805, 1
    %vm825 = vcmp.lt.s32.totalorder %v805, 2
    %vm826 = vcmp.lt.s32.totalorder %v805, 3
    %vm827 = vcmp.lt.s32.totalorder %v805, 4
    %v828 = vsel %vm824, %v808, %v811
    %v829 = vsel %vm827, %v817, 2102212464
    %v830 = vsel %vm826, %v814, %v829
    %v831 = vsel %vm825, %v828, %v830
    %v832 = vsel %vm824, %v811, %v814
    %v833 = vsel %vm827, %v820, 920167782
    %v834 = vsel %vm826, %v817, %v833
    %v835 = vsel %vm825, %v832, %v834
    %v836 = vsel %vm824, %v814, %v817
    %v837 = vsel %vm827, %v823, 1326507024
    %v838 = vsel %vm826, %v820, %v837
    %v839 = vsel %vm825, %v836, %v838
    %v840 = vshll.u32 %v800, 8
    %v841 = vmul.u32.u64.compose %v840, %v839
    %v842 = vextract.low.u32 %v841
    %v843 = vextract.high.u32 %v841
    %v844 = vmul.u32.u64.compose %v840, %v835
    %v845 = vextract.low.u32 %v844
    %v846 = vextract.high.u32 %v844
    %v847 = vmul.u32 %v840, %v831
    %v848 = vadd.s32 %v843, %v845
    %vm849 = vc.u32 %v843, %v845
    %v850 = vadd.s32 %v846, 1
    %v851 = vsel %vm849, %v850, %v846
    %v852 = vadd.s32 %v847, %v851
    %v853 = vadd.s32 %v852, 536870912
    %v854 = vshrl.u32 %v853, 30
    %v855 = vshll.u32 %v854, 30
    %v856 = vsub.s32 %v852, %v855
    %vm857 = vcmp.lt.s32.totalorder %v856, 0
    %v858 = vsub.s32 0, %v856
    %v859 = vsel %vm857, %v858, %v856
    %v860 = vclz %v859
    %v861 = vsub.s32 %v860, 2
    %vm862 = vcmp.gt.s32.totalorder 0, %v861
    %v863 = vsel %vm862, 0, %v861
    %v864 = vsub.s32 32, %v863
    %v865 = vshll.u32 %v856, %v863
    %v866 = vshrl.u32 %v848, %v864
    %v867 = vor.u32 %v865, %v866
    %v868 = vsub.s32 4294967266, %v863
    %v869 = vadd.s32 %v868, 127
    %v870 = vshll.u32 %v869, 23
    %v871 = vor.u32 4788187, %v870
    %v872 = vand.u32 2147483647, %v871
    %v874 = vcvt.s32.f32 %v867
    %v875 = vmul.f32 %v874, %v872
    %v876 = vxor.u32 %v875, 2147483648
    %v877 = vsel %vm794, %v876, %v875
    %v878 = vsub.s32 4, %v854
    %v879 = vsel %vm794, %v878, %v854
    %v880 = vsel %vm793, %v791, %v877
    %v881 = vsel %vm793, 0, %v879
    %v882 = vcosq.f32.pop %v880
    %v883 = vsinq.f32.pop %v880
    %vm884 = vweird.f32 %v791
    %v885 = vadd.s32 %v881, 3
    %v886 = vand.u32 %v885, 3
    %vm887 = vcmp.lt.s32.totalorder %v886, 2
    %vm888 = vcmp.eq.s32.totalorder %v886, 0
    %v889 = vxor.u32 %v883, 2147483648
    %v890 = vsel %vm888, %v882, %v889
    %vm891 = vcmp.eq.s32.totalorder %v886, 2
    %v892 = vxor.u32 %v882, 2147483648
    %v893 = vsel %vm891, %v892, %v883
    %v894 = vsel %vm887, %v890, %v893
    %v895 = vsel %vm884, nan, %v894
    %v896 = vand.u32 2147483647, %v791
    %vm897 = vcmp.le.f32.partialorder %v896, 0.7853982
    %vm898 = vcmp.lt.s32.totalorder %v791, 0
    %v899 = vand.u32 %v791, 2139095040
    %v900 = vshrl.u32 %v899, 23
    %v901 = vsub.s32 %v900, 127
    %v902 = vand.u32 2147483647, %v791
    %v903 = vand.u32 %v902, 8388607
    %v904 = vor.u32 %v903, 8388608
    %v905 = vsub.s32 0, %v904
    %v906 = vadd.s32 %v901, 1
    %vm907 = vcmp.gt.s32.totalorder %v906, 0
    %v908 = vsel %vm907, %v906, 0
    %v909 = vshrl.u32 %v908, 5
    %v910 = vand.u32 %v908, 31
    %v911 = vsub.s32 32, %v910
    %v912 = vshrl.u32 683565275, %v911
    %v913 = vshll.u32 683565275, %v910
    %v914 = vshrl.u32 2475754826, %v911
    %v915 = vor.u32 %v913, %v914
    %v916 = vshll.u32 2475754826, %v910
    %v917 = vshrl.u32 2131351028, %v911
    %v918 = vor.u32 %v916, %v917
    %v919 = vshll.u32 2131351028, %v910
    %v920 = vshrl.u32 2102212464, %v911
    %v921 = vor.u32 %v919, %v920
    %v922 = vshll.u32 2102212464, %v910
    %v923 = vshrl.u32 920167782, %v911
    %v924 = vor.u32 %v922, %v923
    %v925 = vshll.u32 920167782, %v910
    %v926 = vshrl.u32 1326507024, %v911
    %v927 = vor.u32 %v925, %v926
    %vm928 = vcmp.lt.s32.totalorder %v909, 1
    %vm929 = vcmp.lt.s32.totalorder %v909, 2
    %vm930 = vcmp.lt.s32.totalorder %v909, 3
    %vm931 = vcmp.lt.s32.totalorder %v909, 4
    %v932 = vsel %vm928, %v912, %v915
    %v933 = vsel %vm931, %v921, 2102212464
    %v934 = vsel %vm930, %v918, %v933
    %v935 = vsel %vm929, %v932, %v934
    %v936 = vsel %vm928, %v915, %v918
    %v937 = vsel %vm931, %v924, 920167782
    %v938 = vsel %vm930, %v921, %v937
    %v939 = vsel %vm929, %v936, %v938
    %v940 = vsel %vm928, %v918, %v921
    %v941 = vsel %vm931, %v927, 1326507024
    %v942 = vsel %vm930, %v924, %v941
    %v943 = vsel %vm929, %v940, %v942
    %v944 = vshll.u32 %v904, 8
    %v945 = vmul.u32.u64.compose %v944, %v943
    %v946 = vextract.low.u32 %v945
    %v947 = vextract.high.u32 %v945
    %v948 = vmul.u32.u64.compose %v944, %v939
    %v949 = vextract.low.u32 %v948
    %v950 = vextract.high.u32 %v948
    %v951 = vmul.u32 %v944, %v935
    %v952 = vadd.s32 %v947, %v949
    %vm953 = vc.u32 %v947, %v949
    %v954 = vadd.s32 %v950, 1
    %v955 = vsel %vm953, %v954, %v950
    %v956 = vadd.s32 %v951, %v955
    %v957 = vadd.s32 %v956, 536870912
    %v958 = vshrl.u32 %v957, 30
    %v959 = vshll.u32 %v958, 30
    %v960 = vsub.s32 %v956, %v959
    %vm961 = vcmp.lt.s32.totalorder %v960, 0
    %v962 = vsub.s32 0, %v960
    %v963 = vsel %vm961, %v962, %v960
    %v964 = vclz %v963
    %v965 = vsub.s32 %v964, 2
    %vm966 = vcmp.gt.s32.totalorder 0, %v965
    %v967 = vsel %vm966, 0, %v965
    %v968 = vsub.s32 32, %v967
    %v969 = vshll.u32 %v960, %v967
    %v970 = vshrl.u32 %v952, %v968
    %v971 = vor.u32 %v969, %v970
    %v972 = vsub.s32 4294967266, %v967
    %v973 = vadd.s32 %v972, 127
    %v974 = vshll.u32 %v973, 23
    %v975 = vor.u32 4788187, %v974
    %v976 = vand.u32 2147483647, %v975
    %v978 = vcvt.s32.f32 %v971
    %v979 = vmul.f32 %v978, %v976
    %v980 = vxor.u32 %v979, 2147483648
    %v981 = vsel %vm898, %v980, %v979
    %v982 = vsub.s32 4, %v958
    %v983 = vsel %vm898, %v982, %v958
    %v984 = vsel %vm897, %v791, %v981
    %v985 = vsel %vm897, 0, %v983
    %v986 = vcosq.f32.pop %v984
    %v987 = vsinq.f32.pop %v984
    %vm988 = vweird.f32 %v791
    %v989 = vand.u32 %v985, 3
    %vm990 = vcmp.lt.s32.totalorder %v989, 2
    %vm991 = vcmp.eq.s32.totalorder %v989, 0
    %v992 = vxor.u32 %v987, 2147483648
    %v993 = vsel %vm991, %v986, %v992
    %vm994 = vcmp.eq.s32.totalorder %v989, 2
    %v995 = vxor.u32 %v986, 2147483648
    %v996 = vsel %vm994, %v995, %v987
    %v997 = vsel %vm990, %v993, %v996
    %v998 = vsel %vm988, nan, %v997
    %v1000 = vsel %vm250, %v998, 0
    %1002 = vmatprep.subr.mxu0 0.0
    %1003 = vmatpush1.msra.mxu0 0.0
    %1004 = vmatprep.subr.mxu0 0.0
    %1005 = vmatpush1.msra.mxu0 0.0
    %1006 = vmatprep.subr.mxu0 0.0
    %1007 = vmatpush1.msra.mxu0 0.0
    %1008 = vmatprep.subr.mxu0 0.0
    %1009 = vmatpush1.msra.mxu0 0.0
    %1010 = vmatprep.subr.mxu0 0.0
    %1011 = vmatpush1.msra.mxu0 0.0
    %1012 = vmatprep.subr.mxu0 0.0
    %1013 = vmatpush1.msra.mxu0 0.0
    %1014 = vmatprep.subr.mxu0 0.0
    %1015 = vmatpush1.msra.mxu0 0.0
    %1016 = vmatprep.subr.mxu0 0.0
    %1017 = vmatpush1.msra.mxu0 0.0
    %1018 = vmatprep.subr.mxu0 0.0
    %1019 = vmatpush1.msra.mxu0 0.0
    %1020 = vmatprep.subr.mxu0 0.0
    %1021 = vmatpush1.msra.mxu0 0.0
    %1022 = vmatprep.subr.mxu0 0.0
    %1023 = vmatpush1.msra.mxu0 0.0
    %1024 = vmatprep.subr.mxu0 0.0
    %1025 = vmatpush1.msra.mxu0 0.0
    %1026 = vmatprep.subr.mxu0 0.0
    %1027 = vmatpush1.msra.mxu0 0.0
    %1028 = vmatprep.subr.mxu0 0.0
    %1029 = vmatpush1.msra.mxu0 0.0
    %1030 = vmatprep.subr.mxu0 0.0
    %1031 = vmatpush1.msra.mxu0 0.0
    %1032 = vmatprep.subr.mxu0 0.0
    %1033 = vmatpush1.msra.mxu0 %v27
    %1034 = vmatprep.subr.mxu0 0.0
    %1035 = vmatpush2.msra.mxu0 0.0
    %1036 = vmatprep.subr.mxu0 0.0
    %1037 = vmatpush2.msra.mxu0 0.0
    %1038 = vmatprep.subr.mxu0 0.0
    %1039 = vmatpush2.msra.mxu0 0.0
    %1040 = vmatprep.subr.mxu0 0.0
    %1041 = vmatpush2.msra.mxu0 0.0
    %1042 = vmatprep.subr.mxu0 0.0
    %1043 = vmatpush2.msra.mxu0 0.0
    %1044 = vmatprep.subr.mxu0 0.0
    %1045 = vmatpush2.msra.mxu0 0.0
    %1046 = vmatprep.subr.mxu0 0.0
    %1047 = vmatpush2.msra.mxu0 0.0
    %1048 = vmatprep.subr.mxu0 0.0
    %1049 = vmatpush2.msra.mxu0 0.0
    %1050 = vmatprep.subr.mxu0 0.0
    %1051 = vmatpush2.msra.mxu0 0.0
    %1052 = vmatprep.subr.mxu0 0.0
    %1053 = vmatpush2.msra.mxu0 0.0
    %1054 = vmatprep.subr.mxu0 0.0
    %1055 = vmatpush2.msra.mxu0 0.0
    %1056 = vmatprep.subr.mxu0 0.0
    %1057 = vmatpush2.msra.mxu0 0.0
    %1058 = vmatprep.subr.mxu0 0.0
    %1059 = vmatpush2.msra.mxu0 0.0
    %1060 = vmatprep.subr.mxu0 0.0
    %1061 = vmatpush2.msra.mxu0 0.0
    %1062 = vmatprep.subr.mxu0 0.0
    %1063 = vmatpush2.msra.mxu0 0.0
    %1064 = vmatprep.subr.mxu0 0.0
    %1065 = vmatpush2.msra.mxu0 0.0
    %1066 = vmatprep.mubr.f32.mxu0 0.0
    %1067 = vmatmul.mubr.f32.gmra.mxu0 %v1000
    %v1068 = vpop.f32.mrf.mxu0
    %v1069 = vadd.f32 0.0, %v1068
    %v1070 = vpop.f32.mrf.mxu0
    %1071 = vdwg.mxu0
    %v1073 = vsel %vm250, %v895, 0
    %1075 = vmatprep.subr.mxu0 0.0
    %1076 = vmatpush1.msra.mxu0 0.0
    %1077 = vmatprep.subr.mxu0 0.0
    %1078 = vmatpush1.msra.mxu0 0.0
    %1079 = vmatprep.subr.mxu0 0.0
    %1080 = vmatpush1.msra.mxu0 0.0
    %1081 = vmatprep.subr.mxu0 0.0
    %1082 = vmatpush1.msra.mxu0 0.0
    %1083 = vmatprep.subr.mxu0 0.0
    %1084 = vmatpush1.msra.mxu0 0.0
    %1085 = vmatprep.subr.mxu0 0.0
    %1086 = vmatpush1.msra.mxu0 0.0
    %1087 = vmatprep.subr.mxu0 0.0
    %1088 = vmatpush1.msra.mxu0 0.0
    %1089 = vmatprep.subr.mxu0 0.0
    %1090 = vmatpush1.msra.mxu0 0.0
    %1091 = vmatprep.subr.mxu0 0.0
    %1092 = vmatpush1.msra.mxu0 0.0
    %1093 = vmatprep.subr.mxu0 0.0
    %1094 = vmatpush1.msra.mxu0 0.0
    %1095 = vmatprep.subr.mxu0 0.0
    %1096 = vmatpush1.msra.mxu0 0.0
    %1097 = vmatprep.subr.mxu0 0.0
    %1098 = vmatpush1.msra.mxu0 0.0
    %1099 = vmatprep.subr.mxu0 0.0
    %1100 = vmatpush1.msra.mxu0 0.0
    %1101 = vmatprep.subr.mxu0 0.0
    %1102 = vmatpush1.msra.mxu0 0.0
    %1103 = vmatprep.subr.mxu0 0.0
    %1104 = vmatpush1.msra.mxu0 0.0
    %1105 = vmatprep.subr.mxu0 0.0
    %1106 = vmatpush1.msra.mxu0 %v26
    %1107 = vmatprep.subr.mxu0 0.0
    %1108 = vmatpush2.msra.mxu0 0.0
    %1109 = vmatprep.subr.mxu0 0.0
    %1110 = vmatpush2.msra.mxu0 0.0
    %1111 = vmatprep.subr.mxu0 0.0
    %1112 = vmatpush2.msra.mxu0 0.0
    %1113 = vmatprep.subr.mxu0 0.0
    %1114 = vmatpush2.msra.mxu0 0.0
    %1115 = vmatprep.subr.mxu0 0.0
    %1116 = vmatpush2.msra.mxu0 0.0
    %1117 = vmatprep.subr.mxu0 0.0
    %1118 = vmatpush2.msra.mxu0 0.0
    %1119 = vmatprep.subr.mxu0 0.0
    %1120 = vmatpush2.msra.mxu0 0.0
    %1121 = vmatprep.subr.mxu0 0.0
    %1122 = vmatpush2.msra.mxu0 0.0
    %1123 = vmatprep.subr.mxu0 0.0
    %1124 = vmatpush2.msra.mxu0 0.0
    %1125 = vmatprep.subr.mxu0 0.0
    %1126 = vmatpush2.msra.mxu0 0.0
    %1127 = vmatprep.subr.mxu0 0.0
    %1128 = vmatpush2.msra.mxu0 0.0
    %1129 = vmatprep.subr.mxu0 0.0
    %1130 = vmatpush2.msra.mxu0 0.0
    %1131 = vmatprep.subr.mxu0 0.0
    %1132 = vmatpush2.msra.mxu0 0.0
    %1133 = vmatprep.subr.mxu0 0.0
    %1134 = vmatpush2.msra.mxu0 0.0
    %1135 = vmatprep.subr.mxu0 0.0
    %1136 = vmatpush2.msra.mxu0 0.0
    %1137 = vmatprep.subr.mxu0 0.0
    %1138 = vmatpush2.msra.mxu0 0.0
    %1139 = vmatprep.mubr.f32.mxu0 0.0
    %1140 = vmatmul.mubr.f32.gmra.mxu0 %v1073
    %v1141 = vpop.f32.mrf.mxu0
    %v1142 = vadd.f32 %v1069, %v1141
    %v1143 = vpop.f32.mrf.mxu0
    %1144 = vdwg.mxu0
    %v1145 = vmul.f32 %v789, %v401
    %v1146 = vadd.f32 %v1142, %v1145
    %v1147 = vadd.f32 %v1146, %v409
    %v1148 = vmax.f32 %v1147, 0.0
    %1150 = vrot.lane.b32.xlu0 %v1148, 64
    %v1151 = vpop.permute.xlu0 %1150
    %vm1153 = vcmask 785920
    %1154 = vst.msk [vmem:[#allocation2] sm:$0xff] %vm1153, %v1151
    %v1155 = vld [vmem:[%s0] sm:$0xff]
    %1157 = vset.pattern.permute.xlu0 3
    %1158 = vperm.xlu0 %1157, %v1155
    %v1159 = vpop.permute.xlu0 %1158
    %v1161 = vmul.f32 %v1159, %v40
    %v1162 = vand.u32 2147483647, %v1161
    %vm1163 = vcmp.le.f32.partialorder %v1162, 0.7853982
    %vm1164 = vcmp.lt.s32.totalorder %v1161, 0
    %v1165 = vand.u32 %v1161, 2139095040
    %v1166 = vshrl.u32 %v1165, 23
    %v1167 = vsub.s32 %v1166, 127
    %v1168 = vand.u32 2147483647, %v1161
    %v1169 = vand.u32 %v1168, 8388607
    %v1170 = vor.u32 %v1169, 8388608
    %v1171 = vsub.s32 0, %v1170
    %v1172 = vadd.s32 %v1167, 1
    %vm1173 = vcmp.gt.s32.totalorder %v1172, 0
    %v1174 = vsel %vm1173, %v1172, 0
    %v1175 = vshrl.u32 %v1174, 5
    %v1176 = vand.u32 %v1174, 31
    %v1177 = vsub.s32 32, %v1176
    %v1178 = vshrl.u32 683565275, %v1177
    %v1179 = vshll.u32 683565275, %v1176
    %v1180 = vshrl.u32 2475754826, %v1177
    %v1181 = vor.u32 %v1179, %v1180
    %v1182 = vshll.u32 2475754826, %v1176
    %v1183 = vshrl.u32 2131351028, %v1177
    %v1184 = vor.u32 %v1182, %v1183
    %v1185 = vshll.u32 2131351028, %v1176
    %v1186 = vshrl.u32 2102212464, %v1177
    %v1187 = vor.u32 %v1185, %v1186
    %v1188 = vshll.u32 2102212464, %v1176
    %v1189 = vshrl.u32 920167782, %v1177
    %v1190 = vor.u32 %v1188, %v1189
    %v1191 = vshll.u32 920167782, %v1176
    %v1192 = vshrl.u32 1326507024, %v1177
    %v1193 = vor.u32 %v1191, %v1192
    %vm1194 = vcmp.lt.s32.totalorder %v1175, 1
    %vm1195 = vcmp.lt.s32.totalorder %v1175, 2
    %vm1196 = vcmp.lt.s32.totalorder %v1175, 3
    %vm1197 = vcmp.lt.s32.totalorder %v1175, 4
    %v1198 = vsel %vm1194, %v1178, %v1181
    %v1199 = vsel %vm1197, %v1187, 2102212464
    %v1200 = vsel %vm1196, %v1184, %v1199
    %v1201 = vsel %vm1195, %v1198, %v1200
    %v1202 = vsel %vm1194, %v1181, %v1184
    %v1203 = vsel %vm1197, %v1190, 920167782
    %v1204 = vsel %vm1196, %v1187, %v1203
    %v1205 = vsel %vm1195, %v1202, %v1204
    %v1206 = vsel %vm1194, %v1184, %v1187
    %v1207 = vsel %vm1197, %v1193, 1326507024
    %v1208 = vsel %vm1196, %v1190, %v1207
    %v1209 = vsel %vm1195, %v1206, %v1208
    %v1210 = vshll.u32 %v1170, 8
    %v1211 = vmul.u32.u64.compose %v1210, %v1209
    %v1212 = vextract.low.u32 %v1211
    %v1213 = vextract.high.u32 %v1211
    %v1214 = vmul.u32.u64.compose %v1210, %v1205
    %v1215 = vextract.low.u32 %v1214
    %v1216 = vextract.high.u32 %v1214
    %v1217 = vmul.u32 %v1210, %v1201
    %v1218 = vadd.s32 %v1213, %v1215
    %vm1219 = vc.u32 %v1213, %v1215
    %v1220 = vadd.s32 %v1216, 1
    %v1221 = vsel %vm1219, %v1220, %v1216
    %v1222 = vadd.s32 %v1217, %v1221
    %v1223 = vadd.s32 %v1222, 536870912
    %v1224 = vshrl.u32 %v1223, 30
    %v1225 = vshll.u32 %v1224, 30
    %v1226 = vsub.s32 %v1222, %v1225
    %vm1227 = vcmp.lt.s32.totalorder %v1226, 0
    %v1228 = vsub.s32 0, %v1226
    %v1229 = vsel %vm1227, %v1228, %v1226
    %v1230 = vclz %v1229
    %v1231 = vsub.s32 %v1230, 2
    %vm1232 = vcmp.gt.s32.totalorder 0, %v1231
    %v1233 = vsel %vm1232, 0, %v1231
    %v1234 = vsub.s32 32, %v1233
    %v1235 = vshll.u32 %v1226, %v1233
    %v1236 = vshrl.u32 %v1218, %v1234
    %v1237 = vor.u32 %v1235, %v1236
    %v1238 = vsub.s32 4294967266, %v1233
    %v1239 = vadd.s32 %v1238, 127
    %v1240 = vshll.u32 %v1239, 23
    %v1241 = vor.u32 4788187, %v1240
    %v1242 = vand.u32 2147483647, %v1241
    %v1244 = vcvt.s32.f32 %v1237
    %v1245 = vmul.f32 %v1244, %v1242
    %v1246 = vxor.u32 %v1245, 2147483648
    %v1247 = vsel %vm1164, %v1246, %v1245
    %v1248 = vsub.s32 4, %v1224
    %v1249 = vsel %vm1164, %v1248, %v1224
    %v1250 = vsel %vm1163, %v1161, %v1247
    %v1251 = vsel %vm1163, 0, %v1249
    %v1252 = vcosq.f32.pop %v1250
    %v1253 = vsinq.f32.pop %v1250
    %vm1254 = vweird.f32 %v1161
    %v1255 = vadd.s32 %v1251, 3
    %v1256 = vand.u32 %v1255, 3
    %vm1257 = vcmp.lt.s32.totalorder %v1256, 2
    %vm1258 = vcmp.eq.s32.totalorder %v1256, 0
    %v1259 = vxor.u32 %v1253, 2147483648
    %v1260 = vsel %vm1258, %v1252, %v1259
    %vm1261 = vcmp.eq.s32.totalorder %v1256, 2
    %v1262 = vxor.u32 %v1252, 2147483648
    %v1263 = vsel %vm1261, %v1262, %v1253
    %v1264 = vsel %vm1257, %v1260, %v1263
    %v1265 = vsel %vm1254, nan, %v1264
    %v1266 = vand.u32 2147483647, %v1161
    %vm1267 = vcmp.le.f32.partialorder %v1266, 0.7853982
    %vm1268 = vcmp.lt.s32.totalorder %v1161, 0
    %v1269 = vand.u32 %v1161, 2139095040
    %v1270 = vshrl.u32 %v1269, 23
    %v1271 = vsub.s32 %v1270, 127
    %v1272 = vand.u32 2147483647, %v1161
    %v1273 = vand.u32 %v1272, 8388607
    %v1274 = vor.u32 %v1273, 8388608
    %v1275 = vsub.s32 0, %v1274
    %v1276 = vadd.s32 %v1271, 1
    %vm1277 = vcmp.gt.s32.totalorder %v1276, 0
    %v1278 = vsel %vm1277, %v1276, 0
    %v1279 = vshrl.u32 %v1278, 5
    %v1280 = vand.u32 %v1278, 31
    %v1281 = vsub.s32 32, %v1280
    %v1282 = vshrl.u32 683565275, %v1281
    %v1283 = vshll.u32 683565275, %v1280
    %v1284 = vshrl.u32 2475754826, %v1281
    %v1285 = vor.u32 %v1283, %v1284
    %v1286 = vshll.u32 2475754826, %v1280
    %v1287 = vshrl.u32 2131351028, %v1281
    %v1288 = vor.u32 %v1286, %v1287
    %v1289 = vshll.u32 2131351028, %v1280
    %v1290 = vshrl.u32 2102212464, %v1281
    %v1291 = vor.u32 %v1289, %v1290
    %v1292 = vshll.u32 2102212464, %v1280
    %v1293 = vshrl.u32 920167782, %v1281
    %v1294 = vor.u32 %v1292, %v1293
    %v1295 = vshll.u32 920167782, %v1280
    %v1296 = vshrl.u32 1326507024, %v1281
    %v1297 = vor.u32 %v1295, %v1296
    %vm1298 = vcmp.lt.s32.totalorder %v1279, 1
    %vm1299 = vcmp.lt.s32.totalorder %v1279, 2
    %vm1300 = vcmp.lt.s32.totalorder %v1279, 3
    %vm1301 = vcmp.lt.s32.totalorder %v1279, 4
    %v1302 = vsel %vm1298, %v1282, %v1285
    %v1303 = vsel %vm1301, %v1291, 2102212464
    %v1304 = vsel %vm1300, %v1288, %v1303
    %v1305 = vsel %vm1299, %v1302, %v1304
    %v1306 = vsel %vm1298, %v1285, %v1288
    %v1307 = vsel %vm1301, %v1294, 920167782
    %v1308 = vsel %vm1300, %v1291, %v1307
    %v1309 = vsel %vm1299, %v1306, %v1308
    %v1310 = vsel %vm1298, %v1288, %v1291
    %v1311 = vsel %vm1301, %v1297, 1326507024
    %v1312 = vsel %vm1300, %v1294, %v1311
    %v1313 = vsel %vm1299, %v1310, %v1312
    %v1314 = vshll.u32 %v1274, 8
    %v1315 = vmul.u32.u64.compose %v1314, %v1313
    %v1316 = vextract.low.u32 %v1315
    %v1317 = vextract.high.u32 %v1315
    %v1318 = vmul.u32.u64.compose %v1314, %v1309
    %v1319 = vextract.low.u32 %v1318
    %v1320 = vextract.high.u32 %v1318
    %v1321 = vmul.u32 %v1314, %v1305
    %v1322 = vadd.s32 %v1317, %v1319
    %vm1323 = vc.u32 %v1317, %v1319
    %v1324 = vadd.s32 %v1320, 1
    %v1325 = vsel %vm1323, %v1324, %v1320
    %v1326 = vadd.s32 %v1321, %v1325
    %v1327 = vadd.s32 %v1326, 536870912
    %v1328 = vshrl.u32 %v1327, 30
    %v1329 = vshll.u32 %v1328, 30
    %v1330 = vsub.s32 %v1326, %v1329
    %vm1331 = vcmp.lt.s32.totalorder %v1330, 0
    %v1332 = vsub.s32 0, %v1330
    %v1333 = vsel %vm1331, %v1332, %v1330
    %v1334 = vclz %v1333
    %v1335 = vsub.s32 %v1334, 2
    %vm1336 = vcmp.gt.s32.totalorder 0, %v1335
    %v1337 = vsel %vm1336, 0, %v1335
    %v1338 = vsub.s32 32, %v1337
    %v1339 = vshll.u32 %v1330, %v1337
    %v1340 = vshrl.u32 %v1322, %v1338
    %v1341 = vor.u32 %v1339, %v1340
    %v1342 = vsub.s32 4294967266, %v1337
    %v1343 = vadd.s32 %v1342, 127
    %v1344 = vshll.u32 %v1343, 23
    %v1345 = vor.u32 4788187, %v1344
    %v1346 = vand.u32 2147483647, %v1345
    %v1348 = vcvt.s32.f32 %v1341
    %v1349 = vmul.f32 %v1348, %v1346
    %v1350 = vxor.u32 %v1349, 2147483648
    %v1351 = vsel %vm1268, %v1350, %v1349
    %v1352 = vsub.s32 4, %v1328
    %v1353 = vsel %vm1268, %v1352, %v1328
    %v1354 = vsel %vm1267, %v1161, %v1351
    %v1355 = vsel %vm1267, 0, %v1353
    %v1356 = vcosq.f32.pop %v1354
    %v1357 = vsinq.f32.pop %v1354
    %vm1358 = vweird.f32 %v1161
    %v1359 = vand.u32 %v1355, 3
    %vm1360 = vcmp.lt.s32.totalorder %v1359, 2
    %vm1361 = vcmp.eq.s32.totalorder %v1359, 0
    %v1362 = vxor.u32 %v1357, 2147483648
    %v1363 = vsel %vm1361, %v1356, %v1362
    %vm1364 = vcmp.eq.s32.totalorder %v1359, 2
    %v1365 = vxor.u32 %v1356, 2147483648
    %v1366 = vsel %vm1364, %v1365, %v1357
    %v1367 = vsel %vm1360, %v1363, %v1366
    %v1368 = vsel %vm1358, nan, %v1367
    %v1370 = vsel %vm250, %v1368, 0
    %1372 = vmatprep.subr.mxu0 0.0
    %1373 = vmatpush1.msra.mxu0 0.0
    %1374 = vmatprep.subr.mxu0 0.0
    %1375 = vmatpush1.msra.mxu0 0.0
    %1376 = vmatprep.subr.mxu0 0.0
    %1377 = vmatpush1.msra.mxu0 0.0
    %1378 = vmatprep.subr.mxu0 0.0
    %1379 = vmatpush1.msra.mxu0 0.0
    %1380 = vmatprep.subr.mxu0 0.0
    %1381 = vmatpush1.msra.mxu0 0.0
    %1382 = vmatprep.subr.mxu0 0.0
    %1383 = vmatpush1.msra.mxu0 0.0
    %1384 = vmatprep.subr.mxu0 0.0
    %1385 = vmatpush1.msra.mxu0 0.0
    %1386 = vmatprep.subr.mxu0 0.0
    %1387 = vmatpush1.msra.mxu0 0.0
    %1388 = vmatprep.subr.mxu0 0.0
    %1389 = vmatpush1.msra.mxu0 0.0
    %1390 = vmatprep.subr.mxu0 0.0
    %1391 = vmatpush1.msra.mxu0 0.0
    %1392 = vmatprep.subr.mxu0 0.0
    %1393 = vmatpush1.msra.mxu0 0.0
    %1394 = vmatprep.subr.mxu0 0.0
    %1395 = vmatpush1.msra.mxu0 0.0
    %1396 = vmatprep.subr.mxu0 0.0
    %1397 = vmatpush1.msra.mxu0 0.0
    %1398 = vmatprep.subr.mxu0 0.0
    %1399 = vmatpush1.msra.mxu0 0.0
    %1400 = vmatprep.subr.mxu0 0.0
    %1401 = vmatpush1.msra.mxu0 0.0
    %1402 = vmatprep.subr.mxu0 0.0
    %1403 = vmatpush1.msra.mxu0 %v27
    %1404 = vmatprep.subr.mxu0 0.0
    %1405 = vmatpush2.msra.mxu0 0.0
    %1406 = vmatprep.subr.mxu0 0.0
    %1407 = vmatpush2.msra.mxu0 0.0
    %1408 = vmatprep.subr.mxu0 0.0
    %1409 = vmatpush2.msra.mxu0 0.0
    %1410 = vmatprep.subr.mxu0 0.0
    %1411 = vmatpush2.msra.mxu0 0.0
    %1412 = vmatprep.subr.mxu0 0.0
    %1413 = vmatpush2.msra.mxu0 0.0
    %1414 = vmatprep.subr.mxu0 0.0
    %1415 = vmatpush2.msra.mxu0 0.0
    %1416 = vmatprep.subr.mxu0 0.0
    %1417 = vmatpush2.msra.mxu0 0.0
    %1418 = vmatprep.subr.mxu0 0.0
    %1419 = vmatpush2.msra.mxu0 0.0
    %1420 = vmatprep.subr.mxu0 0.0
    %1421 = vmatpush2.msra.mxu0 0.0
    %1422 = vmatprep.subr.mxu0 0.0
    %1423 = vmatpush2.msra.mxu0 0.0
    %1424 = vmatprep.subr.mxu0 0.0
    %1425 = vmatpush2.msra.mxu0 0.0
    %1426 = vmatprep.subr.mxu0 0.0
    %1427 = vmatpush2.msra.mxu0 0.0
    %1428 = vmatprep.subr.mxu0 0.0
    %1429 = vmatpush2.msra.mxu0 0.0
    %1430 = vmatprep.subr.mxu0 0.0
    %1431 = vmatpush2.msra.mxu0 0.0
    %1432 = vmatprep.subr.mxu0 0.0
    %1433 = vmatpush2.msra.mxu0 0.0
    %1434 = vmatprep.subr.mxu0 0.0
    %1435 = vmatpush2.msra.mxu0 0.0
    %1436 = vmatprep.mubr.f32.mxu0 0.0
    %1437 = vmatmul.mubr.f32.gmra.mxu0 %v1370
    %v1438 = vpop.f32.mrf.mxu0
    %v1439 = vadd.f32 0.0, %v1438
    %v1440 = vpop.f32.mrf.mxu0
    %1441 = vdwg.mxu0
    %v1443 = vsel %vm250, %v1265, 0
    %1445 = vmatprep.subr.mxu0 0.0
    %1446 = vmatpush1.msra.mxu0 0.0
    %1447 = vmatprep.subr.mxu0 0.0
    %1448 = vmatpush1.msra.mxu0 0.0
    %1449 = vmatprep.subr.mxu0 0.0
    %1450 = vmatpush1.msra.mxu0 0.0
    %1451 = vmatprep.subr.mxu0 0.0
    %1452 = vmatpush1.msra.mxu0 0.0
    %1453 = vmatprep.subr.mxu0 0.0
    %1454 = vmatpush1.msra.mxu0 0.0
    %1455 = vmatprep.subr.mxu0 0.0
    %1456 = vmatpush1.msra.mxu0 0.0
    %1457 = vmatprep.subr.mxu0 0.0
    %1458 = vmatpush1.msra.mxu0 0.0
    %1459 = vmatprep.subr.mxu0 0.0
    %1460 = vmatpush1.msra.mxu0 0.0
    %1461 = vmatprep.subr.mxu0 0.0
    %1462 = vmatpush1.msra.mxu0 0.0
    %1463 = vmatprep.subr.mxu0 0.0
    %1464 = vmatpush1.msra.mxu0 0.0
    %1465 = vmatprep.subr.mxu0 0.0
    %1466 = vmatpush1.msra.mxu0 0.0
    %1467 = vmatprep.subr.mxu0 0.0
    %1468 = vmatpush1.msra.mxu0 0.0
    %1469 = vmatprep.subr.mxu0 0.0
    %1470 = vmatpush1.msra.mxu0 0.0
    %1471 = vmatprep.subr.mxu0 0.0
    %1472 = vmatpush1.msra.mxu0 0.0
    %1473 = vmatprep.subr.mxu0 0.0
    %1474 = vmatpush1.msra.mxu0 0.0
    %1475 = vmatprep.subr.mxu0 0.0
    %1476 = vmatpush1.msra.mxu0 %v26
    %1477 = vmatprep.subr.mxu0 0.0
    %1478 = vmatpush2.msra.mxu0 0.0
    %1479 = vmatprep.subr.mxu0 0.0
    %1480 = vmatpush2.msra.mxu0 0.0
    %1481 = vmatprep.subr.mxu0 0.0
    %1482 = vmatpush2.msra.mxu0 0.0
    %1483 = vmatprep.subr.mxu0 0.0
    %1484 = vmatpush2.msra.mxu0 0.0
    %1485 = vmatprep.subr.mxu0 0.0
    %1486 = vmatpush2.msra.mxu0 0.0
    %1487 = vmatprep.subr.mxu0 0.0
    %1488 = vmatpush2.msra.mxu0 0.0
    %1489 = vmatprep.subr.mxu0 0.0
    %1490 = vmatpush2.msra.mxu0 0.0
    %1491 = vmatprep.subr.mxu0 0.0
    %1492 = vmatpush2.msra.mxu0 0.0
    %1493 = vmatprep.subr.mxu0 0.0
    %1494 = vmatpush2.msra.mxu0 0.0
    %1495 = vmatprep.subr.mxu0 0.0
    %1496 = vmatpush2.msra.mxu0 0.0
    %1497 = vmatprep.subr.mxu0 0.0
    %1498 = vmatpush2.msra.mxu0 0.0
    %1499 = vmatprep.subr.mxu0 0.0
    %1500 = vmatpush2.msra.mxu0 0.0
    %1501 = vmatprep.subr.mxu0 0.0
    %1502 = vmatpush2.msra.mxu0 0.0
    %1503 = vmatprep.subr.mxu0 0.0
    %1504 = vmatpush2.msra.mxu0 0.0
    %1505 = vmatprep.subr.mxu0 0.0
    %1506 = vmatpush2.msra.mxu0 0.0
    %1507 = vmatprep.subr.mxu0 0.0
    %1508 = vmatpush2.msra.mxu0 0.0
    %1509 = vmatprep.mubr.f32.mxu0 0.0
    %1510 = vmatmul.mubr.f32.gmra.mxu0 %v1443
    %v1511 = vpop.f32.mrf.mxu0
    %v1512 = vadd.f32 %v1439, %v1511
    %v1513 = vpop.f32.mrf.mxu0
    %1514 = vdwg.mxu0
    %v1515 = vmul.f32 %v1159, %v401
    %v1516 = vadd.f32 %v1512, %v1515
    %v1517 = vadd.f32 %v1516, %v409
    %v1518 = vmax.f32 %v1517, 0.0
    %1520 = vrot.lane.b32.xlu0 %v1518, 96
    %v1521 = vpop.permute.xlu0 %1520
    %vm1523 = vcmask 1048320
    %1524 = vst.msk [vmem:[#allocation2] sm:$0xff] %vm1523, %v1521
    // Predicated region
    $region26: #{tpu_custom_call.1} parent=1 // pred_check
      _
    $region27: #{tpu_custom_call.1} parent=1 // pred_check_branch
      %1526 = sbr.rel (0) target = $region29
    $region28: #{tpu_custom_call.1} parent=1 // pred_region
      %s1528 = ssub.s32 128, 128
      %1529 = vsyncadd [#allocation3], %s1528
      %s1531 = sshll.u32 [#allocation2], 4
      %s1532 = int_to_ptr.vmem [resolvable:$true] %s1531
      %1534 = dma.vmem_to_hbm [thread:$0]  %s1532, 128, %s6, [#allocation3]
    $region29: #{tpu_custom_call.1} parent=1 // pred_fallthru
      _
    // Predicated region
    $region30: #{tpu_custom_call.1} parent=1 // pred_check
      _
    $region31: #{tpu_custom_call.1} parent=1 // pred_check_branch
      %1536 = sbr.rel (0) target = $region33
    $region32: #{tpu_custom_call.1} parent=1 // pred_region
      %1537 = dma.done [#allocation3], 128
    $region33: #{tpu_custom_call.1} parent=1 // pred_fallthru
      _
    %1538 = vsyncpa [#allocation3], 1

</llo_original>
